<compile_context>
chip_gen: v7x
topology: tpu7x:2x2x1
jax: 0.10.0
libtpu: 0.0.40
codegen_flags: <defaults>
</compile_context>

<pallas_src>
import functools

import jax
import jax.numpy as jnp
from jax import lax
from jax.experimental import pallas as pl
from jax.experimental.pallas import tpu as pltpu

MIN_NORM = 1e-15
MIN_SQ = MIN_NORM * MIN_NORM
BALL_EPS = 4e-3          # PoincareBall.eps for float32 (HGCN reference implementation)
NEG_PAD = -1e30          # bias value for padded (fake) classes in the head


# ---------------- Poincare-ball math (traced INSIDE the fused kernel) ----------------
def _artanh(x):
    # Real guard (1-1e-15 rounds to 1.0 in f32); single log instead of two.
    x = jnp.clip(x, -(1.0 - 1e-7), 1.0 - 1e-7)
    return 0.5 * jnp.log((1.0 + x) / (1.0 - x))


def _sumsq(x):
    return jnp.sum(x * x, axis=-1, keepdims=True)


def _expmap0_proj(u, u_sumsq, c):
    """proj(expmap0(u)) and the raw norm of the result; one reduction, rsqrt-based."""
    sc = c ** 0.5
    inv_un = lax.rsqrt(jnp.maximum(u_sumsq, MIN_SQ))     # ~ 1 / max(||u||, MIN_NORM)
    un = u_sumsq * inv_un                                # ~ ||u||
    g = jnp.tanh(sc * un) * inv_un * (1.0 / sc)          # expmap0 scale factor (EUP)
    raw_e = g * un                                       # ||expmap0(u)||
    en = jnp.maximum(raw_e, MIN_NORM)
    maxnorm = (1.0 - BALL_EPS) / sc
    scale = jnp.where(en > maxnorm, maxnorm * pl.reciprocal(en, approx=True), 1.0)
    return (g * scale) * u, raw_e * scale


def _proj(x, x_sumsq, c):
    """proj(x) and the raw norm of the result (one reduction, rsqrt-based)."""
    inv_n = lax.rsqrt(jnp.maximum(x_sumsq, MIN_SQ))
    raw = x_sumsq * inv_n
    maxnorm = (1.0 - BALL_EPS) / (c ** 0.5)
    y = jnp.where(raw > maxnorm, (maxnorm * inv_n) * x, x)
    return y, jnp.minimum(raw, maxnorm)


def _proj_from(x, raw, c):
    """proj(x) reusing a precomputed raw norm (zero reductions)."""
    maxnorm = (1.0 - BALL_EPS) / (c ** 0.5)
    inv_n = pl.reciprocal(jnp.maximum(raw, MIN_NORM), approx=True)
    y = jnp.where(raw > maxnorm, (maxnorm * inv_n) * x, x)
    return y, jnp.minimum(raw, maxnorm)


def _logmap0_from(p, raw_p, c):
    """logmap0(p) reusing a precomputed raw norm (zero reductions)."""
    sc = c ** 0.5
    pn = jnp.maximum(raw_p, MIN_NORM)
    return (_artanh(sc * pn) * pl.reciprocal(pn, approx=True) * (1.0 / sc)) * p


def _mobius_matvec(wt, x, x_raw, c):
    """Mobius matvec (wt = W^T, matching x @ W.T) returning value and its raw norm."""
    sc = c ** 0.5
    xn = jnp.maximum(x_raw, MIN_NORM)
    mx = jnp.dot(x, wt, preferred_element_type=jnp.float32)   # small (N,F)x(F,H): keep f32
    mx_sumsq = _sumsq(mx)
    inv_mxn = lax.rsqrt(jnp.maximum(mx_sumsq, MIN_SQ))
    mx_raw = mx_sumsq * inv_mxn                               # ~ ||mx||
    t = jnp.tanh(mx_raw * pl.reciprocal(xn, approx=True) * _artanh(sc * xn))
    scale = t * inv_mxn * (1.0 / sc)                          # = t / (||mx|| * sc)
    res = scale * mx
    res_raw = scale * mx_raw
    # Reuse the squared-norm reduction for the all-zero-row test (review item); differs
    # from the reference abs-sum test only when squares underflow to zero.
    zero_row = mx_sumsq == 0.0
    return (jnp.where(zero_row, jnp.zeros_like(res), res),
            jnp.where(zero_row, jnp.zeros_like(res_raw), res_raw))


def _mobius_add(x, x_raw, y, y_raw, c):
    """Mobius addition reusing precomputed norms of x and y (one reduction: <x,y>)."""
    x2 = x_raw * x_raw
    y2 = y_raw * y_raw
    xy = jnp.sum(x * y, axis=-1, keepdims=True)
    a = 1.0 + 2.0 * c * xy + c * y2
    b = 1.0 - c * x2
    num = a * x + b * y
    denom = 1.0 + 2.0 * c * xy + c * c * x2 * y2
    return num * pl.reciprocal(jnp.maximum(denom, MIN_NORM), approx=True)


def _hgcn_layer(x, x_raw, adj_bf16, wt, hb, hb_raw, c):
    """HyperbolicGraphConvolution (HypLinear -> HypAgg(no att) -> HypAct(ReLU)), eval mode.

    hb / hb_raw are the precomputed proj(expmap0(bias)) and its norm (hoisted to host).
    """
    # HypLinear (weight dropout is identity at eval time)
    mv, mv_raw = _mobius_matvec(wt, x, x_raw, c)
    res, res_raw = _proj_from(mv, mv_raw, c)
    madd = _mobius_add(res, res_raw, hb, hb_raw, c)
    res2, res2_raw = _proj(madd, _sumsq(madd), c)
    # HypAgg (use_att=False): aggregate in the tangent space at the origin.
    xt = _logmap0_from(res2, res2_raw, c)
    support = jnp.dot(adj_bf16, xt.astype(jnp.bfloat16),       # bf16 MXU, f32 accumulate
                      preferred_element_type=jnp.float32)
    h, h_raw = _expmap0_proj(support, _sumsq(support), c)
    # HypAct: ReLU in the tangent space, map back to the ball.
    at = jnp.maximum(_logmap0_from(h, h_raw, c), 0.0)
    out, out_raw = _expmap0_proj(at, _sumsq(at), c)
    out_tan = _logmap0_from(out, out_raw, c)                   # tangent feats for add-pool
    return out, out_raw, out_tan


# ---------------------------------- Fused kernel ----------------------------------
def _fused_forward_kernel(x_ref, adj_ref, onehot_ref,
                          w1t_ref, hb1_ref, hb1n_ref,
                          w2t_ref, hb2_ref, hb2n_ref,
                          w3t_ref, hb3_ref, hb3n_ref,
                          wlt_ref, bl_ref, o_ref, *, c):
    adj = adj_ref[...]          # bf16, loaded into VMEM once, reused by all three layers
    onehot = onehot_ref[...]    # bf16 0/1, exact

    # x = proj(expmap0(proj_tan0(x)))  (proj_tan0 is identity on the Poincare ball)
    x0 = x_ref[...]
    x, x_raw = _expmap0_proj(x0, _sumsq(x0), c)

    pooled = []
    for wt_ref, hb_ref, hbn_ref in ((w1t_ref, hb1_ref, hb1n_ref),
                                    (w2t_ref, hb2_ref, hb2n_ref),
                                    (w3t_ref, hb3_ref, hb3n_ref)):
        x, x_raw, xt = _hgcn_layer(x, x_raw, adj, wt_ref[...], hb_ref[...], hbn_ref[...], c)
        # NewPool2 is identity passthrough (see TODO below), then tangent global_add_pool.
        pooled.append(jnp.dot(onehot, xt.astype(jnp.bfloat16),
                              preferred_element_type=jnp.float32))

    # Head: relu(x1)+relu(x2)+relu(x3) -> Linear -> log_softmax (classes padded to 128).
    h = (jnp.maximum(pooled[0], 0.0)
         + jnp.maximum(pooled[1], 0.0)
         + jnp.maximum(pooled[2], 0.0))
    logits = jnp.dot(h, wlt_ref[...], preferred_element_type=jnp.float32) + bl_ref[...]
    m = jnp.max(logits, axis=-1, keepdims=True)
    z = logits - m
    o_ref[...] = z - jnp.log(jnp.sum(jnp.exp(z), axis=-1, keepdims=True))


# --------------------------------- Model glue ---------------------------------
def edge_to_adj(edge_index, x):
    row, col = edge_index
    # cat([x[row], x[col]], dim=1).sum(-1) / 2  ==  (x[row].sum(-1) + x[col].sum(-1)) / 2
    weights = (jnp.sum(x[row], axis=-1) + jnp.sum(x[col], axis=-1)) * 0.5
    adj = jnp.zeros((x.shape[0], x.shape[0]), jnp.float32)
    # NOTE: with duplicate edges XLA scatter order is unspecified (torch is last-write-wins);
    # the example graph has unique edges so this does not matter here.
    return adj.at[row, col].set(weights)


def new_pool2(x, edge_index):
    # TODO(synk): hyplayers.NewPool2 source is not provided; treated as identity passthrough
    # (consistent with the reuse of the original `adj` and `batch` in the reference forward).
    return x


def _expmap0_proj_host(u, c):
    """Host-side (XLA, one-time) proj(expmap0(u)) — used to hoist the bias chain."""
    sc = float(c) ** 0.5
    un = jnp.maximum(jnp.sqrt(jnp.sum(u * u, axis=-1, keepdims=True)), MIN_NORM)
    e = (jnp.tanh(sc * un) / (sc * un)) * u
    en = jnp.maximum(jnp.sqrt(jnp.sum(e * e, axis=-1, keepdims=True)), MIN_NORM)
    maxnorm = (1.0 - BALL_EPS) / sc
    y = jnp.where(en > maxnorm, e / en * maxnorm, e)
    return y, jnp.minimum(en, maxnorm)


def prepare_params(raw, nclass, c):
    """One-time preprocessing: transposes, hoisted hyperbolic biases, lane-dense head pad."""
    cpad = pl.cdiv(nclass, 128) * 128
    wlt_pad = jnp.zeros((raw["wl"].shape[1], cpad), jnp.float32).at[:, :nclass].set(raw["wl"].T)
    bl_pad = jnp.full((1, cpad), NEG_PAD, jnp.float32).at[:, :nclass].set(raw["bl"])
    out = {"wlt_pad": wlt_pad, "bl_pad": bl_pad}
    for i in (1, 2, 3):
        out[f"w{i}t"] = raw[f"w{i}"].T
        hb, hb_raw = _expmap0_proj_host(raw[f"b{i}"].reshape(1, -1), c)
        out[f"hb{i}"] = hb
        out[f"hb{i}n"] = hb_raw
    return out


def _cost_estimate(n, f, h, g, cpad):
    mm_flops = (2 * n * f * h + 2 * 2 * n * h * h      # HypLinear matvecs, 3 layers
                + 3 * 2 * n * n * h                    # adj aggregation per layer
                + 3 * 2 * g * n * h                    # tangent global_add_pool
                + 2 * g * h * cpad)                    # classifier
    ew_flops = 3 * 40 * n * h                          # Poincare elementwise chain (rough)
    transcendentals = 3 * 12 * n + g * cpad
    bytes_accessed = (4 * (n * f + h * (f + 2 * h + cpad) + 3 * h + g * cpad)
                      + 2 * (n * n + g * n))           # bf16 adj / onehot
    return pl.CostEstimate(flops=int(mm_flops + ew_flops),
                           transcendentals=int(transcendentals),
                           bytes_accessed=int(bytes_accessed))


def hyp_gcn4_forward(prepped, x, edge_index, batch, num_graphs, nclass, c):
    # adj is the only O(N^2) array: stage it (and onehot) in bf16 for the MXU / DMA.
    adj = edge_to_adj(edge_index, x).astype(jnp.bfloat16)
    onehot = (batch[None, :] == jnp.arange(num_graphs)[:, None]).astype(jnp.bfloat16)
    cpad = prepped["bl_pad"].shape[-1]
    n, f = x.shape
    h = prepped["w1t"].shape[1]

    vmem = lambda: pl.BlockSpec(memory_space=pltpu.MemorySpace.VMEM)
    out_pad = pl.pallas_call(
        functools.partial(_fused_forward_kernel, c=c),
        out_shape=jax.ShapeDtypeStruct((num_graphs, cpad), jnp.float32),
        in_specs=[vmem() for _ in range(14)],
        out_specs=vmem(),
        compiler_params=pltpu.CompilerParams(vmem_limit_bytes=32 * 1024 * 1024),
        cost_estimate=_cost_estimate(n, f, h, num_graphs, cpad),
    )(x, adj, onehot,
      prepped["w1t"], prepped["hb1"], prepped["hb1n"],
      prepped["w2t"], prepped["hb2"], prepped["hb2n"],
      prepped["w3t"], prepped["hb3"], prepped["hb3n"],
      prepped["wlt_pad"], prepped["bl_pad"])
    return out_pad[:, :nclass]


# ------------------------------------ Main ------------------------------------
if __name__ == "__main__":
    key = jax.random.PRNGKey(0)
    N, NFEAT, NHID, NCLASS, NGRAPH = 16, 8, 32, 4, 2
    C = 1.0  # args.c

    ks = jax.random.split(key, 6)

    def xavier(k, shape, gain):
        fan_out, fan_in = shape
        bound = gain * (6.0 / (fan_in + fan_out)) ** 0.5
        return jax.random.uniform(k, shape, jnp.float32, -bound, bound)

    raw_params = {
        "w1": xavier(ks[0], (NHID, NFEAT), 2.0 ** 0.5),
        "b1": jnp.zeros((NHID,), jnp.float32),
        "w2": xavier(ks[1], (NHID, NHID), 2.0 ** 0.5),
        "b2": jnp.zeros((NHID,), jnp.float32),
        "w3": xavier(ks[2], (NHID, NHID), 2.0 ** 0.5),
        "b3": jnp.zeros((NHID,), jnp.float32),
        "wl": xavier(ks[3], (NCLASS, NHID), 1.0),
        "bl": jax.random.uniform(ks[4], (NCLASS,), jnp.float32,
                                 -1.0 / NHID ** 0.5, 1.0 / NHID ** 0.5),
    }
    params = prepare_params(raw_params, NCLASS, C)

    # Two 8-node graphs, bidirectional ring edges within each graph (no duplicate edges).
    x = 0.1 * jax.random.normal(ks[5], (N, NFEAT), jnp.float32)
    batch = jnp.concatenate(
        [jnp.zeros(N // 2, jnp.int32), jnp.ones(N // 2, jnp.int32)])
    per = N // NGRAPH
    src, dst = [], []
    for g in range(NGRAPH):
        off = g * per
        for i in range(per):
            src.append(off + i); dst.append(off + (i + 1) % per)
            src.append(off + (i + 1) % per); dst.append(off + i)
    edge_index = (jnp.array(src, jnp.int32), jnp.array(dst, jnp.int32))

    out = hyp_gcn4_forward(params, x, edge_index, batch, NGRAPH, NCLASS, C)
    out = jax.block_until_ready(out)
    assert out.shape == (NGRAPH, NCLASS) and out.dtype == jnp.float32
    assert bool(jnp.all(jnp.isfinite(out)))
    print("KERNEL_OK")
</pallas_src>

<mosaic_0001>
module attributes {stable_mosaic.version = 11 : i64} {
  func.func @_fused_forward_kernel(%arg0: memref<16x8xf32, #tpu.memory_space<vmem>>, %arg1: memref<16x16xbf16, #tpu.memory_space<vmem>>, %arg2: memref<2x16xbf16, #tpu.memory_space<vmem>>, %arg3: memref<8x32xf32, #tpu.memory_space<vmem>>, %arg4: memref<1x32xf32, #tpu.memory_space<vmem>>, %arg5: memref<1x1xf32, #tpu.memory_space<vmem>>, %arg6: memref<32x32xf32, #tpu.memory_space<vmem>>, %arg7: memref<1x32xf32, #tpu.memory_space<vmem>>, %arg8: memref<1x1xf32, #tpu.memory_space<vmem>>, %arg9: memref<32x32xf32, #tpu.memory_space<vmem>>, %arg10: memref<1x32xf32, #tpu.memory_space<vmem>>, %arg11: memref<1x1xf32, #tpu.memory_space<vmem>>, %arg12: memref<32x128xf32, #tpu.memory_space<vmem>>, %arg13: memref<1x128xf32, #tpu.memory_space<vmem>>, %arg14: memref<2x128xf32, #tpu.memory_space<vmem>>) attributes {dimension_semantics = [], scalar_prefetch = 0 : i64, scratch_operands = 0 : i64, tpu.core_type = #tpu.core_type<tc>} {
    %c0 = arith.constant 0 : index
    %c0_0 = arith.constant 0 : index
    %0 = vector.load %arg1[%c0, %c0_0] : memref<16x16xbf16, #tpu.memory_space<vmem>>, vector<16x16xbf16>
    %c0_1 = arith.constant 0 : index
    %c0_2 = arith.constant 0 : index
    %1 = vector.load %arg2[%c0_1, %c0_2] : memref<2x16xbf16, #tpu.memory_space<vmem>>, vector<2x16xbf16>
    %c0_3 = arith.constant 0 : index
    %c0_4 = arith.constant 0 : index
    %2 = vector.load %arg0[%c0_3, %c0_4] : memref<16x8xf32, #tpu.memory_space<vmem>>, vector<16x8xf32>
    %3 = arith.mulf %2, %2 : vector<16x8xf32>
    %cst = arith.constant dense<0.000000e+00> : vector<16xf32>
    %4 = vector.multi_reduction <add>, %3, %cst [1] : vector<16x8xf32> to vector<16xf32>
    %5 = vector.shape_cast %4 : vector<16xf32> to vector<16x1xf32>
    %cst_5 = arith.constant 1.000000e-30 : f32
    %6 = vector.broadcast %cst_5 : f32 to vector<16x1xf32>
    %7 = arith.maximumf %5, %6 : vector<16x1xf32>
    %8 = math.rsqrt %7 : vector<16x1xf32>
    %9 = arith.mulf %5, %8 : vector<16x1xf32>
    %cst_6 = arith.constant 1.000000e+00 : f32
    %10 = vector.broadcast %cst_6 : f32 to vector<16x1xf32>
    %11 = arith.mulf %10, %9 : vector<16x1xf32>
    %12 = math.tanh %11 : vector<16x1xf32>
    %13 = arith.mulf %12, %8 : vector<16x1xf32>
    %cst_7 = arith.constant 1.000000e+00 : f32
    %14 = vector.broadcast %cst_7 : f32 to vector<16x1xf32>
    %15 = arith.mulf %13, %14 : vector<16x1xf32>
    %16 = arith.mulf %15, %9 : vector<16x1xf32>
    %cst_8 = arith.constant 1.000000e-15 : f32
    %17 = vector.broadcast %cst_8 : f32 to vector<16x1xf32>
    %18 = arith.maximumf %16, %17 : vector<16x1xf32>
    %cst_9 = arith.constant 0.995999991 : f32
    %19 = vector.broadcast %cst_9 : f32 to vector<16x1xf32>
    %20 = arith.cmpf ogt, %18, %19 : vector<16x1xf32>
    %21 = tpu.reciprocal %18 {approx = true} : vector<16x1xf32> -> vector<16x1xf32>
    %cst_10 = arith.constant 0.995999991 : f32
    %22 = vector.broadcast %cst_10 : f32 to vector<16x1xf32>
    %23 = arith.mulf %22, %21 : vector<16x1xf32>
    %cst_11 = arith.constant 1.000000e+00 : f32
    %24 = vector.broadcast %cst_11 : f32 to vector<16x1xf32>
    %25 = arith.select %20, %23, %24 : vector<16x1xi1>, vector<16x1xf32>
    %26 = arith.mulf %15, %25 : vector<16x1xf32>
    %27 = vector.broadcast %26 : vector<16x1xf32> to vector<16x8xf32>
    %28 = arith.mulf %27, %2 : vector<16x8xf32>
    %29 = arith.mulf %16, %25 : vector<16x1xf32>
    %c0_12 = arith.constant 0 : index
    %c0_13 = arith.constant 0 : index
    %30 = vector.load %arg3[%c0_12, %c0_13] : memref<8x32xf32, #tpu.memory_space<vmem>>, vector<8x32xf32>
    %c0_14 = arith.constant 0 : index
    %c0_15 = arith.constant 0 : index
    %31 = vector.load %arg4[%c0_14, %c0_15] : memref<1x32xf32, #tpu.memory_space<vmem>>, vector<1x32xf32>
    %c0_16 = arith.constant 0 : index
    %c0_17 = arith.constant 0 : index
    %32 = vector.load %arg5[%c0_16, %c0_17] : memref<1x1xf32, #tpu.memory_space<vmem>>, vector<1x1xf32>
    %cst_18 = arith.constant 1.000000e-15 : f32
    %33 = vector.broadcast %cst_18 : f32 to vector<16x1xf32>
    %34 = arith.maximumf %29, %33 : vector<16x1xf32>
    %cst_19 = arith.constant dense<0.000000e+00> : vector<16x32xf32>
    %35 = tpu.matmul %28, %30, %cst_19 {dimension_numbers = #tpu.dot_dimension_numbers<[1], [0], [0], [1], [0, 0, 1, 1], [], []>} : vector<16x8xf32>, vector<8x32xf32>, vector<16x32xf32> -> vector<16x32xf32>
    %36 = arith.mulf %35, %35 : vector<16x32xf32>
    %cst_20 = arith.constant dense<0.000000e+00> : vector<16xf32>
    %37 = vector.multi_reduction <add>, %36, %cst_20 [1] : vector<16x32xf32> to vector<16xf32>
    %38 = vector.shape_cast %37 : vector<16xf32> to vector<16x1xf32>
    %cst_21 = arith.constant 1.000000e-30 : f32
    %39 = vector.broadcast %cst_21 : f32 to vector<16x1xf32>
    %40 = arith.maximumf %38, %39 : vector<16x1xf32>
    %41 = math.rsqrt %40 : vector<16x1xf32>
    %42 = arith.mulf %38, %41 : vector<16x1xf32>
    %43 = tpu.reciprocal %34 {approx = true} : vector<16x1xf32> -> vector<16x1xf32>
    %44 = arith.mulf %42, %43 : vector<16x1xf32>
    %cst_22 = arith.constant 1.000000e+00 : f32
    %45 = vector.broadcast %cst_22 : f32 to vector<16x1xf32>
    %46 = arith.mulf %45, %34 : vector<16x1xf32>
    %cst_23 = arith.constant -0.99999988 : f32
    %cst_24 = arith.constant 0.99999988 : f32
    %47 = vector.broadcast %cst_23 : f32 to vector<16x1xf32>
    %48 = arith.maximumf %47, %46 : vector<16x1xf32>
    %49 = vector.broadcast %cst_24 : f32 to vector<16x1xf32>
    %50 = arith.minimumf %49, %48 : vector<16x1xf32>
    %cst_25 = arith.constant 1.000000e+00 : f32
    %51 = vector.broadcast %cst_25 : f32 to vector<16x1xf32>
    %52 = arith.addf %51, %50 : vector<16x1xf32>
    %cst_26 = arith.constant 1.000000e+00 : f32
    %53 = vector.broadcast %cst_26 : f32 to vector<16x1xf32>
    %54 = arith.subf %53, %50 : vector<16x1xf32>
    %55 = arith.divf %52, %54 : vector<16x1xf32>
    %56 = math.log %55 : vector<16x1xf32>
    %cst_27 = arith.constant 5.000000e-01 : f32
    %57 = vector.broadcast %cst_27 : f32 to vector<16x1xf32>
    %58 = arith.mulf %57, %56 : vector<16x1xf32>
    %59 = arith.mulf %44, %58 : vector<16x1xf32>
    %60 = math.tanh %59 : vector<16x1xf32>
    %61 = arith.mulf %60, %41 : vector<16x1xf32>
    %cst_28 = arith.constant 1.000000e+00 : f32
    %62 = vector.broadcast %cst_28 : f32 to vector<16x1xf32>
    %63 = arith.mulf %61, %62 : vector<16x1xf32>
    %64 = vector.broadcast %63 : vector<16x1xf32> to vector<16x32xf32>
    %65 = arith.mulf %64, %35 : vector<16x32xf32>
    %66 = arith.mulf %63, %42 : vector<16x1xf32>
    %cst_29 = arith.constant 0.000000e+00 : f32
    %67 = vector.broadcast %cst_29 : f32 to vector<16x1xf32>
    %68 = arith.cmpf oeq, %38, %67 : vector<16x1xf32>
    %cst_30 = arith.constant 0.000000e+00 : f32
    %69 = vector.broadcast %cst_30 : f32 to vector<16x32xf32>
    %70 = vector.shape_cast %68 : vector<16x1xi1> to vector<16x1xi1>
    %71 = vector.broadcast %70 : vector<16x1xi1> to vector<16x32xi1>
    %72 = arith.select %71, %69, %65 : vector<16x32xi1>, vector<16x32xf32>
    %cst_31 = arith.constant 0.000000e+00 : f32
    %73 = vector.broadcast %cst_31 : f32 to vector<16x1xf32>
    %74 = arith.select %68, %73, %66 : vector<16x1xi1>, vector<16x1xf32>
    %cst_32 = arith.constant 1.000000e-15 : f32
    %75 = vector.broadcast %cst_32 : f32 to vector<16x1xf32>
    %76 = arith.maximumf %74, %75 : vector<16x1xf32>
    %77 = tpu.reciprocal %76 {approx = true} : vector<16x1xf32> -> vector<16x1xf32>
    %cst_33 = arith.constant 0.995999991 : f32
    %78 = vector.broadcast %cst_33 : f32 to vector<16x1xf32>
    %79 = arith.cmpf ogt, %74, %78 : vector<16x1xf32>
    %cst_34 = arith.constant 0.995999991 : f32
    %80 = vector.broadcast %cst_34 : f32 to vector<16x1xf32>
    %81 = arith.mulf %80, %77 : vector<16x1xf32>
    %82 = vector.broadcast %81 : vector<16x1xf32> to vector<16x32xf32>
    %83 = arith.mulf %82, %72 : vector<16x32xf32>
    %84 = vector.shape_cast %79 : vector<16x1xi1> to vector<16x1xi1>
    %85 = vector.broadcast %84 : vector<16x1xi1> to vector<16x32xi1>
    %86 = arith.select %85, %83, %72 : vector<16x32xi1>, vector<16x32xf32>
    %cst_35 = arith.constant 0.995999991 : f32
    %87 = vector.broadcast %cst_35 : f32 to vector<16x1xf32>
    %88 = arith.minimumf %74, %87 : vector<16x1xf32>
    %89 = arith.mulf %88, %88 : vector<16x1xf32>
    %90 = arith.mulf %32, %32 : vector<1x1xf32>
    %91 = vector.broadcast %31 : vector<1x32xf32> to vector<16x32xf32>
    %92 = arith.mulf %86, %91 : vector<16x32xf32>
    %cst_36 = arith.constant dense<0.000000e+00> : vector<16xf32>
    %93 = vector.multi_reduction <add>, %92, %cst_36 [1] : vector<16x32xf32> to vector<16xf32>
    %94 = vector.shape_cast %93 : vector<16xf32> to vector<16x1xf32>
    %cst_37 = arith.constant 2.000000e+00 : f32
    %95 = vector.broadcast %cst_37 : f32 to vector<16x1xf32>
    %96 = arith.mulf %95, %94 : vector<16x1xf32>
    %cst_38 = arith.constant 1.000000e+00 : f32
    %97 = vector.broadcast %cst_38 : f32 to vector<16x1xf32>
    %98 = arith.addf %97, %96 : vector<16x1xf32>
    %cst_39 = arith.constant 1.000000e+00 : f32
    %99 = vector.broadcast %cst_39 : f32 to vector<1x1xf32>
    %100 = arith.mulf %99, %90 : vector<1x1xf32>
    %101 = vector.broadcast %100 : vector<1x1xf32> to vector<16x1xf32>
    %102 = arith.addf %98, %101 : vector<16x1xf32>
    %cst_40 = arith.constant 1.000000e+00 : f32
    %103 = vector.broadcast %cst_40 : f32 to vector<16x1xf32>
    %104 = arith.mulf %103, %89 : vector<16x1xf32>
    %cst_41 = arith.constant 1.000000e+00 : f32
    %105 = vector.broadcast %cst_41 : f32 to vector<16x1xf32>
    %106 = arith.subf %105, %104 : vector<16x1xf32>
    %107 = vector.broadcast %102 : vector<16x1xf32> to vector<16x32xf32>
    %108 = arith.mulf %107, %86 : vector<16x32xf32>
    %109 = vector.broadcast %106 : vector<16x1xf32> to vector<16x32xf32>
    %110 = vector.broadcast %31 : vector<1x32xf32> to vector<16x32xf32>
    %111 = arith.mulf %109, %110 : vector<16x32xf32>
    %112 = arith.addf %108, %111 : vector<16x32xf32>
    %cst_42 = arith.constant 2.000000e+00 : f32
    %113 = vector.broadcast %cst_42 : f32 to vector<16x1xf32>
    %114 = arith.mulf %113, %94 : vector<16x1xf32>
    %cst_43 = arith.constant 1.000000e+00 : f32
    %115 = vector.broadcast %cst_43 : f32 to vector<16x1xf32>
    %116 = arith.addf %115, %114 : vector<16x1xf32>
    %cst_44 = arith.constant 1.000000e+00 : f32
    %117 = vector.broadcast %cst_44 : f32 to vector<16x1xf32>
    %118 = arith.mulf %117, %89 : vector<16x1xf32>
    %119 = vector.broadcast %90 : vector<1x1xf32> to vector<16x1xf32>
    %120 = arith.mulf %118, %119 : vector<16x1xf32>
    %121 = arith.addf %116, %120 : vector<16x1xf32>
    %cst_45 = arith.constant 1.000000e-15 : f32
    %122 = vector.broadcast %cst_45 : f32 to vector<16x1xf32>
    %123 = arith.maximumf %121, %122 : vector<16x1xf32>
    %124 = tpu.reciprocal %123 {approx = true} : vector<16x1xf32> -> vector<16x1xf32>
    %125 = vector.broadcast %124 : vector<16x1xf32> to vector<16x32xf32>
    %126 = arith.mulf %112, %125 : vector<16x32xf32>
    %127 = arith.mulf %126, %126 : vector<16x32xf32>
    %cst_46 = arith.constant dense<0.000000e+00> : vector<16xf32>
    %128 = vector.multi_reduction <add>, %127, %cst_46 [1] : vector<16x32xf32> to vector<16xf32>
    %129 = vector.shape_cast %128 : vector<16xf32> to vector<16x1xf32>
    %cst_47 = arith.constant 1.000000e-30 : f32
    %130 = vector.broadcast %cst_47 : f32 to vector<16x1xf32>
    %131 = arith.maximumf %129, %130 : vector<16x1xf32>
    %132 = math.rsqrt %131 : vector<16x1xf32>
    %133 = arith.mulf %129, %132 : vector<16x1xf32>
    %cst_48 = arith.constant 0.995999991 : f32
    %134 = vector.broadcast %cst_48 : f32 to vector<16x1xf32>
    %135 = arith.cmpf ogt, %133, %134 : vector<16x1xf32>
    %cst_49 = arith.constant 0.995999991 : f32
    %136 = vector.broadcast %cst_49 : f32 to vector<16x1xf32>
    %137 = arith.mulf %136, %132 : vector<16x1xf32>
    %138 = vector.broadcast %137 : vector<16x1xf32> to vector<16x32xf32>
    %139 = arith.mulf %138, %126 : vector<16x32xf32>
    %140 = vector.shape_cast %135 : vector<16x1xi1> to vector<16x1xi1>
    %141 = vector.broadcast %140 : vector<16x1xi1> to vector<16x32xi1>
    %142 = arith.select %141, %139, %126 : vector<16x32xi1>, vector<16x32xf32>
    %cst_50 = arith.constant 0.995999991 : f32
    %143 = vector.broadcast %cst_50 : f32 to vector<16x1xf32>
    %144 = arith.minimumf %133, %143 : vector<16x1xf32>
    %cst_51 = arith.constant 1.000000e-15 : f32
    %145 = vector.broadcast %cst_51 : f32 to vector<16x1xf32>
    %146 = arith.maximumf %144, %145 : vector<16x1xf32>
    %cst_52 = arith.constant 1.000000e+00 : f32
    %147 = vector.broadcast %cst_52 : f32 to vector<16x1xf32>
    %148 = arith.mulf %147, %146 : vector<16x1xf32>
    %cst_53 = arith.constant -0.99999988 : f32
    %cst_54 = arith.constant 0.99999988 : f32
    %149 = vector.broadcast %cst_53 : f32 to vector<16x1xf32>
    %150 = arith.maximumf %149, %148 : vector<16x1xf32>
    %151 = vector.broadcast %cst_54 : f32 to vector<16x1xf32>
    %152 = arith.minimumf %151, %150 : vector<16x1xf32>
    %cst_55 = arith.constant 1.000000e+00 : f32
    %153 = vector.broadcast %cst_55 : f32 to vector<16x1xf32>
    %154 = arith.addf %153, %152 : vector<16x1xf32>
    %cst_56 = arith.constant 1.000000e+00 : f32
    %155 = vector.broadcast %cst_56 : f32 to vector<16x1xf32>
    %156 = arith.subf %155, %152 : vector<16x1xf32>
    %157 = arith.divf %154, %156 : vector<16x1xf32>
    %158 = math.log %157 : vector<16x1xf32>
    %cst_57 = arith.constant 5.000000e-01 : f32
    %159 = vector.broadcast %cst_57 : f32 to vector<16x1xf32>
    %160 = arith.mulf %159, %158 : vector<16x1xf32>
    %161 = tpu.reciprocal %146 {approx = true} : vector<16x1xf32> -> vector<16x1xf32>
    %162 = arith.mulf %160, %161 : vector<16x1xf32>
    %cst_58 = arith.constant 1.000000e+00 : f32
    %163 = vector.broadcast %cst_58 : f32 to vector<16x1xf32>
    %164 = arith.mulf %162, %163 : vector<16x1xf32>
    %165 = vector.broadcast %164 : vector<16x1xf32> to vector<16x32xf32>
    %166 = arith.mulf %165, %142 : vector<16x32xf32>
    %167 = arith.truncf %166 : vector<16x32xf32> to vector<16x32xbf16>
    %cst_59 = arith.constant dense<0.000000e+00> : vector<16x32xf32>
    %168 = tpu.matmul %0, %167, %cst_59 {dimension_numbers = #tpu.dot_dimension_numbers<[1], [0], [0], [1], [0, 0, 1, 1], [], []>} : vector<16x16xbf16>, vector<16x32xbf16>, vector<16x32xf32> -> vector<16x32xf32>
    %169 = arith.mulf %168, %168 : vector<16x32xf32>
    %cst_60 = arith.constant dense<0.000000e+00> : vector<16xf32>
    %170 = vector.multi_reduction <add>, %169, %cst_60 [1] : vector<16x32xf32> to vector<16xf32>
    %171 = vector.shape_cast %170 : vector<16xf32> to vector<16x1xf32>
    %cst_61 = arith.constant 1.000000e-30 : f32
    %172 = vector.broadcast %cst_61 : f32 to vector<16x1xf32>
    %173 = arith.maximumf %171, %172 : vector<16x1xf32>
    %174 = math.rsqrt %173 : vector<16x1xf32>
    %175 = arith.mulf %171, %174 : vector<16x1xf32>
    %cst_62 = arith.constant 1.000000e+00 : f32
    %176 = vector.broadcast %cst_62 : f32 to vector<16x1xf32>
    %177 = arith.mulf %176, %175 : vector<16x1xf32>
    %178 = math.tanh %177 : vector<16x1xf32>
    %179 = arith.mulf %178, %174 : vector<16x1xf32>
    %cst_63 = arith.constant 1.000000e+00 : f32
    %180 = vector.broadcast %cst_63 : f32 to vector<16x1xf32>
    %181 = arith.mulf %179, %180 : vector<16x1xf32>
    %182 = arith.mulf %181, %175 : vector<16x1xf32>
    %cst_64 = arith.constant 1.000000e-15 : f32
    %183 = vector.broadcast %cst_64 : f32 to vector<16x1xf32>
    %184 = arith.maximumf %182, %183 : vector<16x1xf32>
    %cst_65 = arith.constant 0.995999991 : f32
    %185 = vector.broadcast %cst_65 : f32 to vector<16x1xf32>
    %186 = arith.cmpf ogt, %184, %185 : vector<16x1xf32>
    %187 = tpu.reciprocal %184 {approx = true} : vector<16x1xf32> -> vector<16x1xf32>
    %cst_66 = arith.constant 0.995999991 : f32
    %188 = vector.broadcast %cst_66 : f32 to vector<16x1xf32>
    %189 = arith.mulf %188, %187 : vector<16x1xf32>
    %cst_67 = arith.constant 1.000000e+00 : f32
    %190 = vector.broadcast %cst_67 : f32 to vector<16x1xf32>
    %191 = arith.select %186, %189, %190 : vector<16x1xi1>, vector<16x1xf32>
    %192 = arith.mulf %181, %191 : vector<16x1xf32>
    %193 = vector.broadcast %192 : vector<16x1xf32> to vector<16x32xf32>
    %194 = arith.mulf %193, %168 : vector<16x32xf32>
    %195 = arith.mulf %182, %191 : vector<16x1xf32>
    %cst_68 = arith.constant 1.000000e-15 : f32
    %196 = vector.broadcast %cst_68 : f32 to vector<16x1xf32>
    %197 = arith.maximumf %195, %196 : vector<16x1xf32>
    %cst_69 = arith.constant 1.000000e+00 : f32
    %198 = vector.broadcast %cst_69 : f32 to vector<16x1xf32>
    %199 = arith.mulf %198, %197 : vector<16x1xf32>
    %cst_70 = arith.constant -0.99999988 : f32
    %cst_71 = arith.constant 0.99999988 : f32
    %200 = vector.broadcast %cst_70 : f32 to vector<16x1xf32>
    %201 = arith.maximumf %200, %199 : vector<16x1xf32>
    %202 = vector.broadcast %cst_71 : f32 to vector<16x1xf32>
    %203 = arith.minimumf %202, %201 : vector<16x1xf32>
    %cst_72 = arith.constant 1.000000e+00 : f32
    %204 = vector.broadcast %cst_72 : f32 to vector<16x1xf32>
    %205 = arith.addf %204, %203 : vector<16x1xf32>
    %cst_73 = arith.constant 1.000000e+00 : f32
    %206 = vector.broadcast %cst_73 : f32 to vector<16x1xf32>
    %207 = arith.subf %206, %203 : vector<16x1xf32>
    %208 = arith.divf %205, %207 : vector<16x1xf32>
    %209 = math.log %208 : vector<16x1xf32>
    %cst_74 = arith.constant 5.000000e-01 : f32
    %210 = vector.broadcast %cst_74 : f32 to vector<16x1xf32>
    %211 = arith.mulf %210, %209 : vector<16x1xf32>
    %212 = tpu.reciprocal %197 {approx = true} : vector<16x1xf32> -> vector<16x1xf32>
    %213 = arith.mulf %211, %212 : vector<16x1xf32>
    %cst_75 = arith.constant 1.000000e+00 : f32
    %214 = vector.broadcast %cst_75 : f32 to vector<16x1xf32>
    %215 = arith.mulf %213, %214 : vector<16x1xf32>
    %216 = vector.broadcast %215 : vector<16x1xf32> to vector<16x32xf32>
    %217 = arith.mulf %216, %194 : vector<16x32xf32>
    %cst_76 = arith.constant 0.000000e+00 : f32
    %218 = vector.broadcast %cst_76 : f32 to vector<16x32xf32>
    %219 = arith.maximumf %217, %218 : vector<16x32xf32>
    %220 = arith.mulf %219, %219 : vector<16x32xf32>
    %cst_77 = arith.constant dense<0.000000e+00> : vector<16xf32>
    %221 = vector.multi_reduction <add>, %220, %cst_77 [1] : vector<16x32xf32> to vector<16xf32>
    %222 = vector.shape_cast %221 : vector<16xf32> to vector<16x1xf32>
    %cst_78 = arith.constant 1.000000e-30 : f32
    %223 = vector.broadcast %cst_78 : f32 to vector<16x1xf32>
    %224 = arith.maximumf %222, %223 : vector<16x1xf32>
    %225 = math.rsqrt %224 : vector<16x1xf32>
    %226 = arith.mulf %222, %225 : vector<16x1xf32>
    %cst_79 = arith.constant 1.000000e+00 : f32
    %227 = vector.broadcast %cst_79 : f32 to vector<16x1xf32>
    %228 = arith.mulf %227, %226 : vector<16x1xf32>
    %229 = math.tanh %228 : vector<16x1xf32>
    %230 = arith.mulf %229, %225 : vector<16x1xf32>
    %cst_80 = arith.constant 1.000000e+00 : f32
    %231 = vector.broadcast %cst_80 : f32 to vector<16x1xf32>
    %232 = arith.mulf %230, %231 : vector<16x1xf32>
    %233 = arith.mulf %232, %226 : vector<16x1xf32>
    %cst_81 = arith.constant 1.000000e-15 : f32
    %234 = vector.broadcast %cst_81 : f32 to vector<16x1xf32>
    %235 = arith.maximumf %233, %234 : vector<16x1xf32>
    %cst_82 = arith.constant 0.995999991 : f32
    %236 = vector.broadcast %cst_82 : f32 to vector<16x1xf32>
    %237 = arith.cmpf ogt, %235, %236 : vector<16x1xf32>
    %238 = tpu.reciprocal %235 {approx = true} : vector<16x1xf32> -> vector<16x1xf32>
    %cst_83 = arith.constant 0.995999991 : f32
    %239 = vector.broadcast %cst_83 : f32 to vector<16x1xf32>
    %240 = arith.mulf %239, %238 : vector<16x1xf32>
    %cst_84 = arith.constant 1.000000e+00 : f32
    %241 = vector.broadcast %cst_84 : f32 to vector<16x1xf32>
    %242 = arith.select %237, %240, %241 : vector<16x1xi1>, vector<16x1xf32>
    %243 = arith.mulf %232, %242 : vector<16x1xf32>
    %244 = vector.broadcast %243 : vector<16x1xf32> to vector<16x32xf32>
    %245 = arith.mulf %244, %219 : vector<16x32xf32>
    %246 = arith.mulf %233, %242 : vector<16x1xf32>
    %cst_85 = arith.constant 1.000000e-15 : f32
    %247 = vector.broadcast %cst_85 : f32 to vector<16x1xf32>
    %248 = arith.maximumf %246, %247 : vector<16x1xf32>
    %cst_86 = arith.constant 1.000000e+00 : f32
    %249 = vector.broadcast %cst_86 : f32 to vector<16x1xf32>
    %250 = arith.mulf %249, %248 : vector<16x1xf32>
    %cst_87 = arith.constant -0.99999988 : f32
    %cst_88 = arith.constant 0.99999988 : f32
    %251 = vector.broadcast %cst_87 : f32 to vector<16x1xf32>
    %252 = arith.maximumf %251, %250 : vector<16x1xf32>
    %253 = vector.broadcast %cst_88 : f32 to vector<16x1xf32>
    %254 = arith.minimumf %253, %252 : vector<16x1xf32>
    %cst_89 = arith.constant 1.000000e+00 : f32
    %255 = vector.broadcast %cst_89 : f32 to vector<16x1xf32>
    %256 = arith.addf %255, %254 : vector<16x1xf32>
    %cst_90 = arith.constant 1.000000e+00 : f32
    %257 = vector.broadcast %cst_90 : f32 to vector<16x1xf32>
    %258 = arith.subf %257, %254 : vector<16x1xf32>
    %259 = arith.divf %256, %258 : vector<16x1xf32>
    %260 = math.log %259 : vector<16x1xf32>
    %cst_91 = arith.constant 5.000000e-01 : f32
    %261 = vector.broadcast %cst_91 : f32 to vector<16x1xf32>
    %262 = arith.mulf %261, %260 : vector<16x1xf32>
    %263 = tpu.reciprocal %248 {approx = true} : vector<16x1xf32> -> vector<16x1xf32>
    %264 = arith.mulf %262, %263 : vector<16x1xf32>
    %cst_92 = arith.constant 1.000000e+00 : f32
    %265 = vector.broadcast %cst_92 : f32 to vector<16x1xf32>
    %266 = arith.mulf %264, %265 : vector<16x1xf32>
    %267 = vector.broadcast %266 : vector<16x1xf32> to vector<16x32xf32>
    %268 = arith.mulf %267, %245 : vector<16x32xf32>
    %269 = arith.truncf %268 : vector<16x32xf32> to vector<16x32xbf16>
    %cst_93 = arith.constant dense<0.000000e+00> : vector<2x32xf32>
    %270 = tpu.matmul %1, %269, %cst_93 {dimension_numbers = #tpu.dot_dimension_numbers<[1], [0], [0], [1], [0, 0, 1, 1], [], []>} : vector<2x16xbf16>, vector<16x32xbf16>, vector<2x32xf32> -> vector<2x32xf32>
    %c0_94 = arith.constant 0 : index
    %c0_95 = arith.constant 0 : index
    %271 = vector.load %arg6[%c0_94, %c0_95] : memref<32x32xf32, #tpu.memory_space<vmem>>, vector<32x32xf32>
    %c0_96 = arith.constant 0 : index
    %c0_97 = arith.constant 0 : index
    %272 = vector.load %arg7[%c0_96, %c0_97] : memref<1x32xf32, #tpu.memory_space<vmem>>, vector<1x32xf32>
    %c0_98 = arith.constant 0 : index
    %c0_99 = arith.constant 0 : index
    %273 = vector.load %arg8[%c0_98, %c0_99] : memref<1x1xf32, #tpu.memory_space<vmem>>, vector<1x1xf32>
    %cst_100 = arith.constant 1.000000e-15 : f32
    %274 = vector.broadcast %cst_100 : f32 to vector<16x1xf32>
    %275 = arith.maximumf %246, %274 : vector<16x1xf32>
    %cst_101 = arith.constant dense<0.000000e+00> : vector<16x32xf32>
    %276 = tpu.matmul %245, %271, %cst_101 {dimension_numbers = #tpu.dot_dimension_numbers<[1], [0], [0], [1], [0, 0, 1, 1], [], []>} : vector<16x32xf32>, vector<32x32xf32>, vector<16x32xf32> -> vector<16x32xf32>
    %277 = arith.mulf %276, %276 : vector<16x32xf32>
    %cst_102 = arith.constant dense<0.000000e+00> : vector<16xf32>
    %278 = vector.multi_reduction <add>, %277, %cst_102 [1] : vector<16x32xf32> to vector<16xf32>
    %279 = vector.shape_cast %278 : vector<16xf32> to vector<16x1xf32>
    %cst_103 = arith.constant 1.000000e-30 : f32
    %280 = vector.broadcast %cst_103 : f32 to vector<16x1xf32>
    %281 = arith.maximumf %279, %280 : vector<16x1xf32>
    %282 = math.rsqrt %281 : vector<16x1xf32>
    %283 = arith.mulf %279, %282 : vector<16x1xf32>
    %284 = tpu.reciprocal %275 {approx = true} : vector<16x1xf32> -> vector<16x1xf32>
    %285 = arith.mulf %283, %284 : vector<16x1xf32>
    %cst_104 = arith.constant 1.000000e+00 : f32
    %286 = vector.broadcast %cst_104 : f32 to vector<16x1xf32>
    %287 = arith.mulf %286, %275 : vector<16x1xf32>
    %cst_105 = arith.constant -0.99999988 : f32
    %cst_106 = arith.constant 0.99999988 : f32
    %288 = vector.broadcast %cst_105 : f32 to vector<16x1xf32>
    %289 = arith.maximumf %288, %287 : vector<16x1xf32>
    %290 = vector.broadcast %cst_106 : f32 to vector<16x1xf32>
    %291 = arith.minimumf %290, %289 : vector<16x1xf32>
    %cst_107 = arith.constant 1.000000e+00 : f32
    %292 = vector.broadcast %cst_107 : f32 to vector<16x1xf32>
    %293 = arith.addf %292, %291 : vector<16x1xf32>
    %cst_108 = arith.constant 1.000000e+00 : f32
    %294 = vector.broadcast %cst_108 : f32 to vector<16x1xf32>
    %295 = arith.subf %294, %291 : vector<16x1xf32>
    %296 = arith.divf %293, %295 : vector<16x1xf32>
    %297 = math.log %296 : vector<16x1xf32>
    %cst_109 = arith.constant 5.000000e-01 : f32
    %298 = vector.broadcast %cst_109 : f32 to vector<16x1xf32>
    %299 = arith.mulf %298, %297 : vector<16x1xf32>
    %300 = arith.mulf %285, %299 : vector<16x1xf32>
    %301 = math.tanh %300 : vector<16x1xf32>
    %302 = arith.mulf %301, %282 : vector<16x1xf32>
    %cst_110 = arith.constant 1.000000e+00 : f32
    %303 = vector.broadcast %cst_110 : f32 to vector<16x1xf32>
    %304 = arith.mulf %302, %303 : vector<16x1xf32>
    %305 = vector.broadcast %304 : vector<16x1xf32> to vector<16x32xf32>
    %306 = arith.mulf %305, %276 : vector<16x32xf32>
    %307 = arith.mulf %304, %283 : vector<16x1xf32>
    %cst_111 = arith.constant 0.000000e+00 : f32
    %308 = vector.broadcast %cst_111 : f32 to vector<16x1xf32>
    %309 = arith.cmpf oeq, %279, %308 : vector<16x1xf32>
    %cst_112 = arith.constant 0.000000e+00 : f32
    %310 = vector.broadcast %cst_112 : f32 to vector<16x32xf32>
    %311 = vector.shape_cast %309 : vector<16x1xi1> to vector<16x1xi1>
    %312 = vector.broadcast %311 : vector<16x1xi1> to vector<16x32xi1>
    %313 = arith.select %312, %310, %306 : vector<16x32xi1>, vector<16x32xf32>
    %cst_113 = arith.constant 0.000000e+00 : f32
    %314 = vector.broadcast %cst_113 : f32 to vector<16x1xf32>
    %315 = arith.select %309, %314, %307 : vector<16x1xi1>, vector<16x1xf32>
    %cst_114 = arith.constant 1.000000e-15 : f32
    %316 = vector.broadcast %cst_114 : f32 to vector<16x1xf32>
    %317 = arith.maximumf %315, %316 : vector<16x1xf32>
    %318 = tpu.reciprocal %317 {approx = true} : vector<16x1xf32> -> vector<16x1xf32>
    %cst_115 = arith.constant 0.995999991 : f32
    %319 = vector.broadcast %cst_115 : f32 to vector<16x1xf32>
    %320 = arith.cmpf ogt, %315, %319 : vector<16x1xf32>
    %cst_116 = arith.constant 0.995999991 : f32
    %321 = vector.broadcast %cst_116 : f32 to vector<16x1xf32>
    %322 = arith.mulf %321, %318 : vector<16x1xf32>
    %323 = vector.broadcast %322 : vector<16x1xf32> to vector<16x32xf32>
    %324 = arith.mulf %323, %313 : vector<16x32xf32>
    %325 = vector.shape_cast %320 : vector<16x1xi1> to vector<16x1xi1>
    %326 = vector.broadcast %325 : vector<16x1xi1> to vector<16x32xi1>
    %327 = arith.select %326, %324, %313 : vector<16x32xi1>, vector<16x32xf32>
    %cst_117 = arith.constant 0.995999991 : f32
    %328 = vector.broadcast %cst_117 : f32 to vector<16x1xf32>
    %329 = arith.minimumf %315, %328 : vector<16x1xf32>
    %330 = arith.mulf %329, %329 : vector<16x1xf32>
    %331 = arith.mulf %273, %273 : vector<1x1xf32>
    %332 = vector.broadcast %272 : vector<1x32xf32> to vector<16x32xf32>
    %333 = arith.mulf %327, %332 : vector<16x32xf32>
    %cst_118 = arith.constant dense<0.000000e+00> : vector<16xf32>
    %334 = vector.multi_reduction <add>, %333, %cst_118 [1] : vector<16x32xf32> to vector<16xf32>
    %335 = vector.shape_cast %334 : vector<16xf32> to vector<16x1xf32>
    %cst_119 = arith.constant 2.000000e+00 : f32
    %336 = vector.broadcast %cst_119 : f32 to vector<16x1xf32>
    %337 = arith.mulf %336, %335 : vector<16x1xf32>
    %cst_120 = arith.constant 1.000000e+00 : f32
    %338 = vector.broadcast %cst_120 : f32 to vector<16x1xf32>
    %339 = arith.addf %338, %337 : vector<16x1xf32>
    %cst_121 = arith.constant 1.000000e+00 : f32
    %340 = vector.broadcast %cst_121 : f32 to vector<1x1xf32>
    %341 = arith.mulf %340, %331 : vector<1x1xf32>
    %342 = vector.broadcast %341 : vector<1x1xf32> to vector<16x1xf32>
    %343 = arith.addf %339, %342 : vector<16x1xf32>
    %cst_122 = arith.constant 1.000000e+00 : f32
    %344 = vector.broadcast %cst_122 : f32 to vector<16x1xf32>
    %345 = arith.mulf %344, %330 : vector<16x1xf32>
    %cst_123 = arith.constant 1.000000e+00 : f32
    %346 = vector.broadcast %cst_123 : f32 to vector<16x1xf32>
    %347 = arith.subf %346, %345 : vector<16x1xf32>
    %348 = vector.broadcast %343 : vector<16x1xf32> to vector<16x32xf32>
    %349 = arith.mulf %348, %327 : vector<16x32xf32>
    %350 = vector.broadcast %347 : vector<16x1xf32> to vector<16x32xf32>
    %351 = vector.broadcast %272 : vector<1x32xf32> to vector<16x32xf32>
    %352 = arith.mulf %350, %351 : vector<16x32xf32>
    %353 = arith.addf %349, %352 : vector<16x32xf32>
    %cst_124 = arith.constant 2.000000e+00 : f32
    %354 = vector.broadcast %cst_124 : f32 to vector<16x1xf32>
    %355 = arith.mulf %354, %335 : vector<16x1xf32>
    %cst_125 = arith.constant 1.000000e+00 : f32
    %356 = vector.broadcast %cst_125 : f32 to vector<16x1xf32>
    %357 = arith.addf %356, %355 : vector<16x1xf32>
    %cst_126 = arith.constant 1.000000e+00 : f32
    %358 = vector.broadcast %cst_126 : f32 to vector<16x1xf32>
    %359 = arith.mulf %358, %330 : vector<16x1xf32>
    %360 = vector.broadcast %331 : vector<1x1xf32> to vector<16x1xf32>
    %361 = arith.mulf %359, %360 : vector<16x1xf32>
    %362 = arith.addf %357, %361 : vector<16x1xf32>
    %cst_127 = arith.constant 1.000000e-15 : f32
    %363 = vector.broadcast %cst_127 : f32 to vector<16x1xf32>
    %364 = arith.maximumf %362, %363 : vector<16x1xf32>
    %365 = tpu.reciprocal %364 {approx = true} : vector<16x1xf32> -> vector<16x1xf32>
    %366 = vector.broadcast %365 : vector<16x1xf32> to vector<16x32xf32>
    %367 = arith.mulf %353, %366 : vector<16x32xf32>
    %368 = arith.mulf %367, %367 : vector<16x32xf32>
    %cst_128 = arith.constant dense<0.000000e+00> : vector<16xf32>
    %369 = vector.multi_reduction <add>, %368, %cst_128 [1] : vector<16x32xf32> to vector<16xf32>
    %370 = vector.shape_cast %369 : vector<16xf32> to vector<16x1xf32>
    %cst_129 = arith.constant 1.000000e-30 : f32
    %371 = vector.broadcast %cst_129 : f32 to vector<16x1xf32>
    %372 = arith.maximumf %370, %371 : vector<16x1xf32>
    %373 = math.rsqrt %372 : vector<16x1xf32>
    %374 = arith.mulf %370, %373 : vector<16x1xf32>
    %cst_130 = arith.constant 0.995999991 : f32
    %375 = vector.broadcast %cst_130 : f32 to vector<16x1xf32>
    %376 = arith.cmpf ogt, %374, %375 : vector<16x1xf32>
    %cst_131 = arith.constant 0.995999991 : f32
    %377 = vector.broadcast %cst_131 : f32 to vector<16x1xf32>
    %378 = arith.mulf %377, %373 : vector<16x1xf32>
    %379 = vector.broadcast %378 : vector<16x1xf32> to vector<16x32xf32>
    %380 = arith.mulf %379, %367 : vector<16x32xf32>
    %381 = vector.shape_cast %376 : vector<16x1xi1> to vector<16x1xi1>
    %382 = vector.broadcast %381 : vector<16x1xi1> to vector<16x32xi1>
    %383 = arith.select %382, %380, %367 : vector<16x32xi1>, vector<16x32xf32>
    %cst_132 = arith.constant 0.995999991 : f32
    %384 = vector.broadcast %cst_132 : f32 to vector<16x1xf32>
    %385 = arith.minimumf %374, %384 : vector<16x1xf32>
    %cst_133 = arith.constant 1.000000e-15 : f32
    %386 = vector.broadcast %cst_133 : f32 to vector<16x1xf32>
    %387 = arith.maximumf %385, %386 : vector<16x1xf32>
    %cst_134 = arith.constant 1.000000e+00 : f32
    %388 = vector.broadcast %cst_134 : f32 to vector<16x1xf32>
    %389 = arith.mulf %388, %387 : vector<16x1xf32>
    %cst_135 = arith.constant -0.99999988 : f32
    %cst_136 = arith.constant 0.99999988 : f32
    %390 = vector.broadcast %cst_135 : f32 to vector<16x1xf32>
    %391 = arith.maximumf %390, %389 : vector<16x1xf32>
    %392 = vector.broadcast %cst_136 : f32 to vector<16x1xf32>
    %393 = arith.minimumf %392, %391 : vector<16x1xf32>
    %cst_137 = arith.constant 1.000000e+00 : f32
    %394 = vector.broadcast %cst_137 : f32 to vector<16x1xf32>
    %395 = arith.addf %394, %393 : vector<16x1xf32>
    %cst_138 = arith.constant 1.000000e+00 : f32
    %396 = vector.broadcast %cst_138 : f32 to vector<16x1xf32>
    %397 = arith.subf %396, %393 : vector<16x1xf32>
    %398 = arith.divf %395, %397 : vector<16x1xf32>
    %399 = math.log %398 : vector<16x1xf32>
    %cst_139 = arith.constant 5.000000e-01 : f32
    %400 = vector.broadcast %cst_139 : f32 to vector<16x1xf32>
    %401 = arith.mulf %400, %399 : vector<16x1xf32>
    %402 = tpu.reciprocal %387 {approx = true} : vector<16x1xf32> -> vector<16x1xf32>
    %403 = arith.mulf %401, %402 : vector<16x1xf32>
    %cst_140 = arith.constant 1.000000e+00 : f32
    %404 = vector.broadcast %cst_140 : f32 to vector<16x1xf32>
    %405 = arith.mulf %403, %404 : vector<16x1xf32>
    %406 = vector.broadcast %405 : vector<16x1xf32> to vector<16x32xf32>
    %407 = arith.mulf %406, %383 : vector<16x32xf32>
    %408 = arith.truncf %407 : vector<16x32xf32> to vector<16x32xbf16>
    %cst_141 = arith.constant dense<0.000000e+00> : vector<16x32xf32>
    %409 = tpu.matmul %0, %408, %cst_141 {dimension_numbers = #tpu.dot_dimension_numbers<[1], [0], [0], [1], [0, 0, 1, 1], [], []>} : vector<16x16xbf16>, vector<16x32xbf16>, vector<16x32xf32> -> vector<16x32xf32>
    %410 = arith.mulf %409, %409 : vector<16x32xf32>
    %cst_142 = arith.constant dense<0.000000e+00> : vector<16xf32>
    %411 = vector.multi_reduction <add>, %410, %cst_142 [1] : vector<16x32xf32> to vector<16xf32>
    %412 = vector.shape_cast %411 : vector<16xf32> to vector<16x1xf32>
    %cst_143 = arith.constant 1.000000e-30 : f32
    %413 = vector.broadcast %cst_143 : f32 to vector<16x1xf32>
    %414 = arith.maximumf %412, %413 : vector<16x1xf32>
    %415 = math.rsqrt %414 : vector<16x1xf32>
    %416 = arith.mulf %412, %415 : vector<16x1xf32>
    %cst_144 = arith.constant 1.000000e+00 : f32
    %417 = vector.broadcast %cst_144 : f32 to vector<16x1xf32>
    %418 = arith.mulf %417, %416 : vector<16x1xf32>
    %419 = math.tanh %418 : vector<16x1xf32>
    %420 = arith.mulf %419, %415 : vector<16x1xf32>
    %cst_145 = arith.constant 1.000000e+00 : f32
    %421 = vector.broadcast %cst_145 : f32 to vector<16x1xf32>
    %422 = arith.mulf %420, %421 : vector<16x1xf32>
    %423 = arith.mulf %422, %416 : vector<16x1xf32>
    %cst_146 = arith.constant 1.000000e-15 : f32
    %424 = vector.broadcast %cst_146 : f32 to vector<16x1xf32>
    %425 = arith.maximumf %423, %424 : vector<16x1xf32>
    %cst_147 = arith.constant 0.995999991 : f32
    %426 = vector.broadcast %cst_147 : f32 to vector<16x1xf32>
    %427 = arith.cmpf ogt, %425, %426 : vector<16x1xf32>
    %428 = tpu.reciprocal %425 {approx = true} : vector<16x1xf32> -> vector<16x1xf32>
    %cst_148 = arith.constant 0.995999991 : f32
    %429 = vector.broadcast %cst_148 : f32 to vector<16x1xf32>
    %430 = arith.mulf %429, %428 : vector<16x1xf32>
    %cst_149 = arith.constant 1.000000e+00 : f32
    %431 = vector.broadcast %cst_149 : f32 to vector<16x1xf32>
    %432 = arith.select %427, %430, %431 : vector<16x1xi1>, vector<16x1xf32>
    %433 = arith.mulf %422, %432 : vector<16x1xf32>
    %434 = vector.broadcast %433 : vector<16x1xf32> to vector<16x32xf32>
    %435 = arith.mulf %434, %409 : vector<16x32xf32>
    %436 = arith.mulf %423, %432 : vector<16x1xf32>
    %cst_150 = arith.constant 1.000000e-15 : f32
    %437 = vector.broadcast %cst_150 : f32 to vector<16x1xf32>
    %438 = arith.maximumf %436, %437 : vector<16x1xf32>
    %cst_151 = arith.constant 1.000000e+00 : f32
    %439 = vector.broadcast %cst_151 : f32 to vector<16x1xf32>
    %440 = arith.mulf %439, %438 : vector<16x1xf32>
    %cst_152 = arith.constant -0.99999988 : f32
    %cst_153 = arith.constant 0.99999988 : f32
    %441 = vector.broadcast %cst_152 : f32 to vector<16x1xf32>
    %442 = arith.maximumf %441, %440 : vector<16x1xf32>
    %443 = vector.broadcast %cst_153 : f32 to vector<16x1xf32>
    %444 = arith.minimumf %443, %442 : vector<16x1xf32>
    %cst_154 = arith.constant 1.000000e+00 : f32
    %445 = vector.broadcast %cst_154 : f32 to vector<16x1xf32>
    %446 = arith.addf %445, %444 : vector<16x1xf32>
    %cst_155 = arith.constant 1.000000e+00 : f32
    %447 = vector.broadcast %cst_155 : f32 to vector<16x1xf32>
    %448 = arith.subf %447, %444 : vector<16x1xf32>
    %449 = arith.divf %446, %448 : vector<16x1xf32>
    %450 = math.log %449 : vector<16x1xf32>
    %cst_156 = arith.constant 5.000000e-01 : f32
    %451 = vector.broadcast %cst_156 : f32 to vector<16x1xf32>
    %452 = arith.mulf %451, %450 : vector<16x1xf32>
    %453 = tpu.reciprocal %438 {approx = true} : vector<16x1xf32> -> vector<16x1xf32>
    %454 = arith.mulf %452, %453 : vector<16x1xf32>
    %cst_157 = arith.constant 1.000000e+00 : f32
    %455 = vector.broadcast %cst_157 : f32 to vector<16x1xf32>
    %456 = arith.mulf %454, %455 : vector<16x1xf32>
    %457 = vector.broadcast %456 : vector<16x1xf32> to vector<16x32xf32>
    %458 = arith.mulf %457, %435 : vector<16x32xf32>
    %cst_158 = arith.constant 0.000000e+00 : f32
    %459 = vector.broadcast %cst_158 : f32 to vector<16x32xf32>
    %460 = arith.maximumf %458, %459 : vector<16x32xf32>
    %461 = arith.mulf %460, %460 : vector<16x32xf32>
    %cst_159 = arith.constant dense<0.000000e+00> : vector<16xf32>
    %462 = vector.multi_reduction <add>, %461, %cst_159 [1] : vector<16x32xf32> to vector<16xf32>
    %463 = vector.shape_cast %462 : vector<16xf32> to vector<16x1xf32>
    %cst_160 = arith.constant 1.000000e-30 : f32
    %464 = vector.broadcast %cst_160 : f32 to vector<16x1xf32>
    %465 = arith.maximumf %463, %464 : vector<16x1xf32>
    %466 = math.rsqrt %465 : vector<16x1xf32>
    %467 = arith.mulf %463, %466 : vector<16x1xf32>
    %cst_161 = arith.constant 1.000000e+00 : f32
    %468 = vector.broadcast %cst_161 : f32 to vector<16x1xf32>
    %469 = arith.mulf %468, %467 : vector<16x1xf32>
    %470 = math.tanh %469 : vector<16x1xf32>
    %471 = arith.mulf %470, %466 : vector<16x1xf32>
    %cst_162 = arith.constant 1.000000e+00 : f32
    %472 = vector.broadcast %cst_162 : f32 to vector<16x1xf32>
    %473 = arith.mulf %471, %472 : vector<16x1xf32>
    %474 = arith.mulf %473, %467 : vector<16x1xf32>
    %cst_163 = arith.constant 1.000000e-15 : f32
    %475 = vector.broadcast %cst_163 : f32 to vector<16x1xf32>
    %476 = arith.maximumf %474, %475 : vector<16x1xf32>
    %cst_164 = arith.constant 0.995999991 : f32
    %477 = vector.broadcast %cst_164 : f32 to vector<16x1xf32>
    %478 = arith.cmpf ogt, %476, %477 : vector<16x1xf32>
    %479 = tpu.reciprocal %476 {approx = true} : vector<16x1xf32> -> vector<16x1xf32>
    %cst_165 = arith.constant 0.995999991 : f32
    %480 = vector.broadcast %cst_165 : f32 to vector<16x1xf32>
    %481 = arith.mulf %480, %479 : vector<16x1xf32>
    %cst_166 = arith.constant 1.000000e+00 : f32
    %482 = vector.broadcast %cst_166 : f32 to vector<16x1xf32>
    %483 = arith.select %478, %481, %482 : vector<16x1xi1>, vector<16x1xf32>
    %484 = arith.mulf %473, %483 : vector<16x1xf32>
    %485 = vector.broadcast %484 : vector<16x1xf32> to vector<16x32xf32>
    %486 = arith.mulf %485, %460 : vector<16x32xf32>
    %487 = arith.mulf %474, %483 : vector<16x1xf32>
    %cst_167 = arith.constant 1.000000e-15 : f32
    %488 = vector.broadcast %cst_167 : f32 to vector<16x1xf32>
    %489 = arith.maximumf %487, %488 : vector<16x1xf32>
    %cst_168 = arith.constant 1.000000e+00 : f32
    %490 = vector.broadcast %cst_168 : f32 to vector<16x1xf32>
    %491 = arith.mulf %490, %489 : vector<16x1xf32>
    %cst_169 = arith.constant -0.99999988 : f32
    %cst_170 = arith.constant 0.99999988 : f32
    %492 = vector.broadcast %cst_169 : f32 to vector<16x1xf32>
    %493 = arith.maximumf %492, %491 : vector<16x1xf32>
    %494 = vector.broadcast %cst_170 : f32 to vector<16x1xf32>
    %495 = arith.minimumf %494, %493 : vector<16x1xf32>
    %cst_171 = arith.constant 1.000000e+00 : f32
    %496 = vector.broadcast %cst_171 : f32 to vector<16x1xf32>
    %497 = arith.addf %496, %495 : vector<16x1xf32>
    %cst_172 = arith.constant 1.000000e+00 : f32
    %498 = vector.broadcast %cst_172 : f32 to vector<16x1xf32>
    %499 = arith.subf %498, %495 : vector<16x1xf32>
    %500 = arith.divf %497, %499 : vector<16x1xf32>
    %501 = math.log %500 : vector<16x1xf32>
    %cst_173 = arith.constant 5.000000e-01 : f32
    %502 = vector.broadcast %cst_173 : f32 to vector<16x1xf32>
    %503 = arith.mulf %502, %501 : vector<16x1xf32>
    %504 = tpu.reciprocal %489 {approx = true} : vector<16x1xf32> -> vector<16x1xf32>
    %505 = arith.mulf %503, %504 : vector<16x1xf32>
    %cst_174 = arith.constant 1.000000e+00 : f32
    %506 = vector.broadcast %cst_174 : f32 to vector<16x1xf32>
    %507 = arith.mulf %505, %506 : vector<16x1xf32>
    %508 = vector.broadcast %507 : vector<16x1xf32> to vector<16x32xf32>
    %509 = arith.mulf %508, %486 : vector<16x32xf32>
    %510 = arith.truncf %509 : vector<16x32xf32> to vector<16x32xbf16>
    %cst_175 = arith.constant dense<0.000000e+00> : vector<2x32xf32>
    %511 = tpu.matmul %1, %510, %cst_175 {dimension_numbers = #tpu.dot_dimension_numbers<[1], [0], [0], [1], [0, 0, 1, 1], [], []>} : vector<2x16xbf16>, vector<16x32xbf16>, vector<2x32xf32> -> vector<2x32xf32>
    %c0_176 = arith.constant 0 : index
    %c0_177 = arith.constant 0 : index
    %512 = vector.load %arg9[%c0_176, %c0_177] : memref<32x32xf32, #tpu.memory_space<vmem>>, vector<32x32xf32>
    %c0_178 = arith.constant 0 : index
    %c0_179 = arith.constant 0 : index
    %513 = vector.load %arg10[%c0_178, %c0_179] : memref<1x32xf32, #tpu.memory_space<vmem>>, vector<1x32xf32>
    %c0_180 = arith.constant 0 : index
    %c0_181 = arith.constant 0 : index
    %514 = vector.load %arg11[%c0_180, %c0_181] : memref<1x1xf32, #tpu.memory_space<vmem>>, vector<1x1xf32>
    %cst_182 = arith.constant 1.000000e-15 : f32
    %515 = vector.broadcast %cst_182 : f32 to vector<16x1xf32>
    %516 = arith.maximumf %487, %515 : vector<16x1xf32>
    %cst_183 = arith.constant dense<0.000000e+00> : vector<16x32xf32>
    %517 = tpu.matmul %486, %512, %cst_183 {dimension_numbers = #tpu.dot_dimension_numbers<[1], [0], [0], [1], [0, 0, 1, 1], [], []>} : vector<16x32xf32>, vector<32x32xf32>, vector<16x32xf32> -> vector<16x32xf32>
    %518 = arith.mulf %517, %517 : vector<16x32xf32>
    %cst_184 = arith.constant dense<0.000000e+00> : vector<16xf32>
    %519 = vector.multi_reduction <add>, %518, %cst_184 [1] : vector<16x32xf32> to vector<16xf32>
    %520 = vector.shape_cast %519 : vector<16xf32> to vector<16x1xf32>
    %cst_185 = arith.constant 1.000000e-30 : f32
    %521 = vector.broadcast %cst_185 : f32 to vector<16x1xf32>
    %522 = arith.maximumf %520, %521 : vector<16x1xf32>
    %523 = math.rsqrt %522 : vector<16x1xf32>
    %524 = arith.mulf %520, %523 : vector<16x1xf32>
    %525 = tpu.reciprocal %516 {approx = true} : vector<16x1xf32> -> vector<16x1xf32>
    %526 = arith.mulf %524, %525 : vector<16x1xf32>
    %cst_186 = arith.constant 1.000000e+00 : f32
    %527 = vector.broadcast %cst_186 : f32 to vector<16x1xf32>
    %528 = arith.mulf %527, %516 : vector<16x1xf32>
    %cst_187 = arith.constant -0.99999988 : f32
    %cst_188 = arith.constant 0.99999988 : f32
    %529 = vector.broadcast %cst_187 : f32 to vector<16x1xf32>
    %530 = arith.maximumf %529, %528 : vector<16x1xf32>
    %531 = vector.broadcast %cst_188 : f32 to vector<16x1xf32>
    %532 = arith.minimumf %531, %530 : vector<16x1xf32>
    %cst_189 = arith.constant 1.000000e+00 : f32
    %533 = vector.broadcast %cst_189 : f32 to vector<16x1xf32>
    %534 = arith.addf %533, %532 : vector<16x1xf32>
    %cst_190 = arith.constant 1.000000e+00 : f32
    %535 = vector.broadcast %cst_190 : f32 to vector<16x1xf32>
    %536 = arith.subf %535, %532 : vector<16x1xf32>
    %537 = arith.divf %534, %536 : vector<16x1xf32>
    %538 = math.log %537 : vector<16x1xf32>
    %cst_191 = arith.constant 5.000000e-01 : f32
    %539 = vector.broadcast %cst_191 : f32 to vector<16x1xf32>
    %540 = arith.mulf %539, %538 : vector<16x1xf32>
    %541 = arith.mulf %526, %540 : vector<16x1xf32>
    %542 = math.tanh %541 : vector<16x1xf32>
    %543 = arith.mulf %542, %523 : vector<16x1xf32>
    %cst_192 = arith.constant 1.000000e+00 : f32
    %544 = vector.broadcast %cst_192 : f32 to vector<16x1xf32>
    %545 = arith.mulf %543, %544 : vector<16x1xf32>
    %546 = vector.broadcast %545 : vector<16x1xf32> to vector<16x32xf32>
    %547 = arith.mulf %546, %517 : vector<16x32xf32>
    %548 = arith.mulf %545, %524 : vector<16x1xf32>
    %cst_193 = arith.constant 0.000000e+00 : f32
    %549 = vector.broadcast %cst_193 : f32 to vector<16x1xf32>
    %550 = arith.cmpf oeq, %520, %549 : vector<16x1xf32>
    %cst_194 = arith.constant 0.000000e+00 : f32
    %551 = vector.broadcast %cst_194 : f32 to vector<16x32xf32>
    %552 = vector.shape_cast %550 : vector<16x1xi1> to vector<16x1xi1>
    %553 = vector.broadcast %552 : vector<16x1xi1> to vector<16x32xi1>
    %554 = arith.select %553, %551, %547 : vector<16x32xi1>, vector<16x32xf32>
    %cst_195 = arith.constant 0.000000e+00 : f32
    %555 = vector.broadcast %cst_195 : f32 to vector<16x1xf32>
    %556 = arith.select %550, %555, %548 : vector<16x1xi1>, vector<16x1xf32>
    %cst_196 = arith.constant 1.000000e-15 : f32
    %557 = vector.broadcast %cst_196 : f32 to vector<16x1xf32>
    %558 = arith.maximumf %556, %557 : vector<16x1xf32>
    %559 = tpu.reciprocal %558 {approx = true} : vector<16x1xf32> -> vector<16x1xf32>
    %cst_197 = arith.constant 0.995999991 : f32
    %560 = vector.broadcast %cst_197 : f32 to vector<16x1xf32>
    %561 = arith.cmpf ogt, %556, %560 : vector<16x1xf32>
    %cst_198 = arith.constant 0.995999991 : f32
    %562 = vector.broadcast %cst_198 : f32 to vector<16x1xf32>
    %563 = arith.mulf %562, %559 : vector<16x1xf32>
    %564 = vector.broadcast %563 : vector<16x1xf32> to vector<16x32xf32>
    %565 = arith.mulf %564, %554 : vector<16x32xf32>
    %566 = vector.shape_cast %561 : vector<16x1xi1> to vector<16x1xi1>
    %567 = vector.broadcast %566 : vector<16x1xi1> to vector<16x32xi1>
    %568 = arith.select %567, %565, %554 : vector<16x32xi1>, vector<16x32xf32>
    %cst_199 = arith.constant 0.995999991 : f32
    %569 = vector.broadcast %cst_199 : f32 to vector<16x1xf32>
    %570 = arith.minimumf %556, %569 : vector<16x1xf32>
    %571 = arith.mulf %570, %570 : vector<16x1xf32>
    %572 = arith.mulf %514, %514 : vector<1x1xf32>
    %573 = vector.broadcast %513 : vector<1x32xf32> to vector<16x32xf32>
    %574 = arith.mulf %568, %573 : vector<16x32xf32>
    %cst_200 = arith.constant dense<0.000000e+00> : vector<16xf32>
    %575 = vector.multi_reduction <add>, %574, %cst_200 [1] : vector<16x32xf32> to vector<16xf32>
    %576 = vector.shape_cast %575 : vector<16xf32> to vector<16x1xf32>
    %cst_201 = arith.constant 2.000000e+00 : f32
    %577 = vector.broadcast %cst_201 : f32 to vector<16x1xf32>
    %578 = arith.mulf %577, %576 : vector<16x1xf32>
    %cst_202 = arith.constant 1.000000e+00 : f32
    %579 = vector.broadcast %cst_202 : f32 to vector<16x1xf32>
    %580 = arith.addf %579, %578 : vector<16x1xf32>
    %cst_203 = arith.constant 1.000000e+00 : f32
    %581 = vector.broadcast %cst_203 : f32 to vector<1x1xf32>
    %582 = arith.mulf %581, %572 : vector<1x1xf32>
    %583 = vector.broadcast %582 : vector<1x1xf32> to vector<16x1xf32>
    %584 = arith.addf %580, %583 : vector<16x1xf32>
    %cst_204 = arith.constant 1.000000e+00 : f32
    %585 = vector.broadcast %cst_204 : f32 to vector<16x1xf32>
    %586 = arith.mulf %585, %571 : vector<16x1xf32>
    %cst_205 = arith.constant 1.000000e+00 : f32
    %587 = vector.broadcast %cst_205 : f32 to vector<16x1xf32>
    %588 = arith.subf %587, %586 : vector<16x1xf32>
    %589 = vector.broadcast %584 : vector<16x1xf32> to vector<16x32xf32>
    %590 = arith.mulf %589, %568 : vector<16x32xf32>
    %591 = vector.broadcast %588 : vector<16x1xf32> to vector<16x32xf32>
    %592 = vector.broadcast %513 : vector<1x32xf32> to vector<16x32xf32>
    %593 = arith.mulf %591, %592 : vector<16x32xf32>
    %594 = arith.addf %590, %593 : vector<16x32xf32>
    %cst_206 = arith.constant 2.000000e+00 : f32
    %595 = vector.broadcast %cst_206 : f32 to vector<16x1xf32>
    %596 = arith.mulf %595, %576 : vector<16x1xf32>
    %cst_207 = arith.constant 1.000000e+00 : f32
    %597 = vector.broadcast %cst_207 : f32 to vector<16x1xf32>
    %598 = arith.addf %597, %596 : vector<16x1xf32>
    %cst_208 = arith.constant 1.000000e+00 : f32
    %599 = vector.broadcast %cst_208 : f32 to vector<16x1xf32>
    %600 = arith.mulf %599, %571 : vector<16x1xf32>
    %601 = vector.broadcast %572 : vector<1x1xf32> to vector<16x1xf32>
    %602 = arith.mulf %600, %601 : vector<16x1xf32>
    %603 = arith.addf %598, %602 : vector<16x1xf32>
    %cst_209 = arith.constant 1.000000e-15 : f32
    %604 = vector.broadcast %cst_209 : f32 to vector<16x1xf32>
    %605 = arith.maximumf %603, %604 : vector<16x1xf32>
    %606 = tpu.reciprocal %605 {approx = true} : vector<16x1xf32> -> vector<16x1xf32>
    %607 = vector.broadcast %606 : vector<16x1xf32> to vector<16x32xf32>
    %608 = arith.mulf %594, %607 : vector<16x32xf32>
    %609 = arith.mulf %608, %608 : vector<16x32xf32>
    %cst_210 = arith.constant dense<0.000000e+00> : vector<16xf32>
    %610 = vector.multi_reduction <add>, %609, %cst_210 [1] : vector<16x32xf32> to vector<16xf32>
    %611 = vector.shape_cast %610 : vector<16xf32> to vector<16x1xf32>
    %cst_211 = arith.constant 1.000000e-30 : f32
    %612 = vector.broadcast %cst_211 : f32 to vector<16x1xf32>
    %613 = arith.maximumf %611, %612 : vector<16x1xf32>
    %614 = math.rsqrt %613 : vector<16x1xf32>
    %615 = arith.mulf %611, %614 : vector<16x1xf32>
    %cst_212 = arith.constant 0.995999991 : f32
    %616 = vector.broadcast %cst_212 : f32 to vector<16x1xf32>
    %617 = arith.cmpf ogt, %615, %616 : vector<16x1xf32>
    %cst_213 = arith.constant 0.995999991 : f32
    %618 = vector.broadcast %cst_213 : f32 to vector<16x1xf32>
    %619 = arith.mulf %618, %614 : vector<16x1xf32>
    %620 = vector.broadcast %619 : vector<16x1xf32> to vector<16x32xf32>
    %621 = arith.mulf %620, %608 : vector<16x32xf32>
    %622 = vector.shape_cast %617 : vector<16x1xi1> to vector<16x1xi1>
    %623 = vector.broadcast %622 : vector<16x1xi1> to vector<16x32xi1>
    %624 = arith.select %623, %621, %608 : vector<16x32xi1>, vector<16x32xf32>
    %cst_214 = arith.constant 0.995999991 : f32
    %625 = vector.broadcast %cst_214 : f32 to vector<16x1xf32>
    %626 = arith.minimumf %615, %625 : vector<16x1xf32>
    %cst_215 = arith.constant 1.000000e-15 : f32
    %627 = vector.broadcast %cst_215 : f32 to vector<16x1xf32>
    %628 = arith.maximumf %626, %627 : vector<16x1xf32>
    %cst_216 = arith.constant 1.000000e+00 : f32
    %629 = vector.broadcast %cst_216 : f32 to vector<16x1xf32>
    %630 = arith.mulf %629, %628 : vector<16x1xf32>
    %cst_217 = arith.constant -0.99999988 : f32
    %cst_218 = arith.constant 0.99999988 : f32
    %631 = vector.broadcast %cst_217 : f32 to vector<16x1xf32>
    %632 = arith.maximumf %631, %630 : vector<16x1xf32>
    %633 = vector.broadcast %cst_218 : f32 to vector<16x1xf32>
    %634 = arith.minimumf %633, %632 : vector<16x1xf32>
    %cst_219 = arith.constant 1.000000e+00 : f32
    %635 = vector.broadcast %cst_219 : f32 to vector<16x1xf32>
    %636 = arith.addf %635, %634 : vector<16x1xf32>
    %cst_220 = arith.constant 1.000000e+00 : f32
    %637 = vector.broadcast %cst_220 : f32 to vector<16x1xf32>
    %638 = arith.subf %637, %634 : vector<16x1xf32>
    %639 = arith.divf %636, %638 : vector<16x1xf32>
    %640 = math.log %639 : vector<16x1xf32>
    %cst_221 = arith.constant 5.000000e-01 : f32
    %641 = vector.broadcast %cst_221 : f32 to vector<16x1xf32>
    %642 = arith.mulf %641, %640 : vector<16x1xf32>
    %643 = tpu.reciprocal %628 {approx = true} : vector<16x1xf32> -> vector<16x1xf32>
    %644 = arith.mulf %642, %643 : vector<16x1xf32>
    %cst_222 = arith.constant 1.000000e+00 : f32
    %645 = vector.broadcast %cst_222 : f32 to vector<16x1xf32>
    %646 = arith.mulf %644, %645 : vector<16x1xf32>
    %647 = vector.broadcast %646 : vector<16x1xf32> to vector<16x32xf32>
    %648 = arith.mulf %647, %624 : vector<16x32xf32>
    %649 = arith.truncf %648 : vector<16x32xf32> to vector<16x32xbf16>
    %cst_223 = arith.constant dense<0.000000e+00> : vector<16x32xf32>
    %650 = tpu.matmul %0, %649, %cst_223 {dimension_numbers = #tpu.dot_dimension_numbers<[1], [0], [0], [1], [0, 0, 1, 1], [], []>} : vector<16x16xbf16>, vector<16x32xbf16>, vector<16x32xf32> -> vector<16x32xf32>
    %651 = arith.mulf %650, %650 : vector<16x32xf32>
    %cst_224 = arith.constant dense<0.000000e+00> : vector<16xf32>
    %652 = vector.multi_reduction <add>, %651, %cst_224 [1] : vector<16x32xf32> to vector<16xf32>
    %653 = vector.shape_cast %652 : vector<16xf32> to vector<16x1xf32>
    %cst_225 = arith.constant 1.000000e-30 : f32
    %654 = vector.broadcast %cst_225 : f32 to vector<16x1xf32>
    %655 = arith.maximumf %653, %654 : vector<16x1xf32>
    %656 = math.rsqrt %655 : vector<16x1xf32>
    %657 = arith.mulf %653, %656 : vector<16x1xf32>
    %cst_226 = arith.constant 1.000000e+00 : f32
    %658 = vector.broadcast %cst_226 : f32 to vector<16x1xf32>
    %659 = arith.mulf %658, %657 : vector<16x1xf32>
    %660 = math.tanh %659 : vector<16x1xf32>
    %661 = arith.mulf %660, %656 : vector<16x1xf32>
    %cst_227 = arith.constant 1.000000e+00 : f32
    %662 = vector.broadcast %cst_227 : f32 to vector<16x1xf32>
    %663 = arith.mulf %661, %662 : vector<16x1xf32>
    %664 = arith.mulf %663, %657 : vector<16x1xf32>
    %cst_228 = arith.constant 1.000000e-15 : f32
    %665 = vector.broadcast %cst_228 : f32 to vector<16x1xf32>
    %666 = arith.maximumf %664, %665 : vector<16x1xf32>
    %cst_229 = arith.constant 0.995999991 : f32
    %667 = vector.broadcast %cst_229 : f32 to vector<16x1xf32>
    %668 = arith.cmpf ogt, %666, %667 : vector<16x1xf32>
    %669 = tpu.reciprocal %666 {approx = true} : vector<16x1xf32> -> vector<16x1xf32>
    %cst_230 = arith.constant 0.995999991 : f32
    %670 = vector.broadcast %cst_230 : f32 to vector<16x1xf32>
    %671 = arith.mulf %670, %669 : vector<16x1xf32>
    %cst_231 = arith.constant 1.000000e+00 : f32
    %672 = vector.broadcast %cst_231 : f32 to vector<16x1xf32>
    %673 = arith.select %668, %671, %672 : vector<16x1xi1>, vector<16x1xf32>
    %674 = arith.mulf %663, %673 : vector<16x1xf32>
    %675 = vector.broadcast %674 : vector<16x1xf32> to vector<16x32xf32>
    %676 = arith.mulf %675, %650 : vector<16x32xf32>
    %677 = arith.mulf %664, %673 : vector<16x1xf32>
    %cst_232 = arith.constant 1.000000e-15 : f32
    %678 = vector.broadcast %cst_232 : f32 to vector<16x1xf32>
    %679 = arith.maximumf %677, %678 : vector<16x1xf32>
    %cst_233 = arith.constant 1.000000e+00 : f32
    %680 = vector.broadcast %cst_233 : f32 to vector<16x1xf32>
    %681 = arith.mulf %680, %679 : vector<16x1xf32>
    %cst_234 = arith.constant -0.99999988 : f32
    %cst_235 = arith.constant 0.99999988 : f32
    %682 = vector.broadcast %cst_234 : f32 to vector<16x1xf32>
    %683 = arith.maximumf %682, %681 : vector<16x1xf32>
    %684 = vector.broadcast %cst_235 : f32 to vector<16x1xf32>
    %685 = arith.minimumf %684, %683 : vector<16x1xf32>
    %cst_236 = arith.constant 1.000000e+00 : f32
    %686 = vector.broadcast %cst_236 : f32 to vector<16x1xf32>
    %687 = arith.addf %686, %685 : vector<16x1xf32>
    %cst_237 = arith.constant 1.000000e+00 : f32
    %688 = vector.broadcast %cst_237 : f32 to vector<16x1xf32>
    %689 = arith.subf %688, %685 : vector<16x1xf32>
    %690 = arith.divf %687, %689 : vector<16x1xf32>
    %691 = math.log %690 : vector<16x1xf32>
    %cst_238 = arith.constant 5.000000e-01 : f32
    %692 = vector.broadcast %cst_238 : f32 to vector<16x1xf32>
    %693 = arith.mulf %692, %691 : vector<16x1xf32>
    %694 = tpu.reciprocal %679 {approx = true} : vector<16x1xf32> -> vector<16x1xf32>
    %695 = arith.mulf %693, %694 : vector<16x1xf32>
    %cst_239 = arith.constant 1.000000e+00 : f32
    %696 = vector.broadcast %cst_239 : f32 to vector<16x1xf32>
    %697 = arith.mulf %695, %696 : vector<16x1xf32>
    %698 = vector.broadcast %697 : vector<16x1xf32> to vector<16x32xf32>
    %699 = arith.mulf %698, %676 : vector<16x32xf32>
    %cst_240 = arith.constant 0.000000e+00 : f32
    %700 = vector.broadcast %cst_240 : f32 to vector<16x32xf32>
    %701 = arith.maximumf %699, %700 : vector<16x32xf32>
    %702 = arith.mulf %701, %701 : vector<16x32xf32>
    %cst_241 = arith.constant dense<0.000000e+00> : vector<16xf32>
    %703 = vector.multi_reduction <add>, %702, %cst_241 [1] : vector<16x32xf32> to vector<16xf32>
    %704 = vector.shape_cast %703 : vector<16xf32> to vector<16x1xf32>
    %cst_242 = arith.constant 1.000000e-30 : f32
    %705 = vector.broadcast %cst_242 : f32 to vector<16x1xf32>
    %706 = arith.maximumf %704, %705 : vector<16x1xf32>
    %707 = math.rsqrt %706 : vector<16x1xf32>
    %708 = arith.mulf %704, %707 : vector<16x1xf32>
    %cst_243 = arith.constant 1.000000e+00 : f32
    %709 = vector.broadcast %cst_243 : f32 to vector<16x1xf32>
    %710 = arith.mulf %709, %708 : vector<16x1xf32>
    %711 = math.tanh %710 : vector<16x1xf32>
    %712 = arith.mulf %711, %707 : vector<16x1xf32>
    %cst_244 = arith.constant 1.000000e+00 : f32
    %713 = vector.broadcast %cst_244 : f32 to vector<16x1xf32>
    %714 = arith.mulf %712, %713 : vector<16x1xf32>
    %715 = arith.mulf %714, %708 : vector<16x1xf32>
    %cst_245 = arith.constant 1.000000e-15 : f32
    %716 = vector.broadcast %cst_245 : f32 to vector<16x1xf32>
    %717 = arith.maximumf %715, %716 : vector<16x1xf32>
    %cst_246 = arith.constant 0.995999991 : f32
    %718 = vector.broadcast %cst_246 : f32 to vector<16x1xf32>
    %719 = arith.cmpf ogt, %717, %718 : vector<16x1xf32>
    %720 = tpu.reciprocal %717 {approx = true} : vector<16x1xf32> -> vector<16x1xf32>
    %cst_247 = arith.constant 0.995999991 : f32
    %721 = vector.broadcast %cst_247 : f32 to vector<16x1xf32>
    %722 = arith.mulf %721, %720 : vector<16x1xf32>
    %cst_248 = arith.constant 1.000000e+00 : f32
    %723 = vector.broadcast %cst_248 : f32 to vector<16x1xf32>
    %724 = arith.select %719, %722, %723 : vector<16x1xi1>, vector<16x1xf32>
    %725 = arith.mulf %714, %724 : vector<16x1xf32>
    %726 = vector.broadcast %725 : vector<16x1xf32> to vector<16x32xf32>
    %727 = arith.mulf %726, %701 : vector<16x32xf32>
    %728 = arith.mulf %715, %724 : vector<16x1xf32>
    %cst_249 = arith.constant 1.000000e-15 : f32
    %729 = vector.broadcast %cst_249 : f32 to vector<16x1xf32>
    %730 = arith.maximumf %728, %729 : vector<16x1xf32>
    %cst_250 = arith.constant 1.000000e+00 : f32
    %731 = vector.broadcast %cst_250 : f32 to vector<16x1xf32>
    %732 = arith.mulf %731, %730 : vector<16x1xf32>
    %cst_251 = arith.constant -0.99999988 : f32
    %cst_252 = arith.constant 0.99999988 : f32
    %733 = vector.broadcast %cst_251 : f32 to vector<16x1xf32>
    %734 = arith.maximumf %733, %732 : vector<16x1xf32>
    %735 = vector.broadcast %cst_252 : f32 to vector<16x1xf32>
    %736 = arith.minimumf %735, %734 : vector<16x1xf32>
    %cst_253 = arith.constant 1.000000e+00 : f32
    %737 = vector.broadcast %cst_253 : f32 to vector<16x1xf32>
    %738 = arith.addf %737, %736 : vector<16x1xf32>
    %cst_254 = arith.constant 1.000000e+00 : f32
    %739 = vector.broadcast %cst_254 : f32 to vector<16x1xf32>
    %740 = arith.subf %739, %736 : vector<16x1xf32>
    %741 = arith.divf %738, %740 : vector<16x1xf32>
    %742 = math.log %741 : vector<16x1xf32>
    %cst_255 = arith.constant 5.000000e-01 : f32
    %743 = vector.broadcast %cst_255 : f32 to vector<16x1xf32>
    %744 = arith.mulf %743, %742 : vector<16x1xf32>
    %745 = tpu.reciprocal %730 {approx = true} : vector<16x1xf32> -> vector<16x1xf32>
    %746 = arith.mulf %744, %745 : vector<16x1xf32>
    %cst_256 = arith.constant 1.000000e+00 : f32
    %747 = vector.broadcast %cst_256 : f32 to vector<16x1xf32>
    %748 = arith.mulf %746, %747 : vector<16x1xf32>
    %749 = vector.broadcast %748 : vector<16x1xf32> to vector<16x32xf32>
    %750 = arith.mulf %749, %727 : vector<16x32xf32>
    %751 = arith.truncf %750 : vector<16x32xf32> to vector<16x32xbf16>
    %cst_257 = arith.constant dense<0.000000e+00> : vector<2x32xf32>
    %752 = tpu.matmul %1, %751, %cst_257 {dimension_numbers = #tpu.dot_dimension_numbers<[1], [0], [0], [1], [0, 0, 1, 1], [], []>} : vector<2x16xbf16>, vector<16x32xbf16>, vector<2x32xf32> -> vector<2x32xf32>
    %cst_258 = arith.constant 0.000000e+00 : f32
    %753 = vector.broadcast %cst_258 : f32 to vector<2x32xf32>
    %754 = arith.maximumf %270, %753 : vector<2x32xf32>
    %cst_259 = arith.constant 0.000000e+00 : f32
    %755 = vector.broadcast %cst_259 : f32 to vector<2x32xf32>
    %756 = arith.maximumf %511, %755 : vector<2x32xf32>
    %757 = arith.addf %754, %756 : vector<2x32xf32>
    %cst_260 = arith.constant 0.000000e+00 : f32
    %758 = vector.broadcast %cst_260 : f32 to vector<2x32xf32>
    %759 = arith.maximumf %752, %758 : vector<2x32xf32>
    %760 = arith.addf %757, %759 : vector<2x32xf32>
    %c0_261 = arith.constant 0 : index
    %c0_262 = arith.constant 0 : index
    %761 = vector.load %arg12[%c0_261, %c0_262] : memref<32x128xf32, #tpu.memory_space<vmem>>, vector<32x128xf32>
    %cst_263 = arith.constant dense<0.000000e+00> : vector<2x128xf32>
    %762 = tpu.matmul %760, %761, %cst_263 {dimension_numbers = #tpu.dot_dimension_numbers<[1], [0], [0], [1], [0, 0, 1, 1], [], []>} : vector<2x32xf32>, vector<32x128xf32>, vector<2x128xf32> -> vector<2x128xf32>
    %c0_264 = arith.constant 0 : index
    %c0_265 = arith.constant 0 : index
    %763 = vector.load %arg13[%c0_264, %c0_265] : memref<1x128xf32, #tpu.memory_space<vmem>>, vector<1x128xf32>
    %764 = vector.broadcast %763 : vector<1x128xf32> to vector<2x128xf32>
    %765 = arith.addf %762, %764 : vector<2x128xf32>
    %cst_266 = arith.constant dense<0xFF800000> : vector<2xf32>
    %766 = vector.multi_reduction <maximumf>, %765, %cst_266 [1] : vector<2x128xf32> to vector<2xf32>
    %767 = vector.shape_cast %766 : vector<2xf32> to vector<2x1xf32>
    %768 = vector.broadcast %767 : vector<2x1xf32> to vector<2x128xf32>
    %769 = arith.subf %765, %768 : vector<2x128xf32>
    %770 = math.exp %769 : vector<2x128xf32>
    %cst_267 = arith.constant dense<0.000000e+00> : vector<2xf32>
    %771 = vector.multi_reduction <add>, %770, %cst_267 [1] : vector<2x128xf32> to vector<2xf32>
    %772 = vector.shape_cast %771 : vector<2xf32> to vector<2x1xf32>
    %773 = math.log %772 : vector<2x1xf32>
    %774 = vector.broadcast %773 : vector<2x1xf32> to vector<2x128xf32>
    %775 = arith.subf %769, %774 : vector<2x128xf32>
    %c0_268 = arith.constant 0 : index
    %c0_269 = arith.constant 0 : index
    %776 = vector.load %arg14[%c0_268, %c0_269] : memref<2x128xf32, #tpu.memory_space<vmem>>, vector<2x128xf32>
    tpu.vector_store %arg14[%c0_268, %c0_269], %775 {strides = array<i32>} : memref<2x128xf32, #tpu.memory_space<vmem>>, vector<2x128xf32>,
    return
  }
}

</mosaic_0001>

<llo_original>
// kernel: tpu_custom_call.1
$region0: #{tpu_custom_call.1}
  #allocation0 [shape = 'u32[]', space=smem, size = 0x4, offset = 0x4, fixed_abs, tag = 'smem constant byte address 0x4 - core index']
  #allocation1 [shape = 'u32[144,128]{1,0:T(1,128)}', space=vmem, size = 0x12000, scoped, tag = 'internal scratch']
  #allocation2 [shape = 'f32[1,1]{1,0:T(1,128)S(1)}', space=vmem, size = 0x200, scoped, tag = 'scoped memory for tpu_custom_call.1']
  #allocation3 [shape = 'f32[1,1]{1,0:T(1,128)S(1)}', space=vmem, size = 0x200, scoped, tag = 'scoped memory for tpu_custom_call.1']
  #allocation4 [shape = 'f32[1,1]{1,0:T(1,128)S(1)}', space=vmem, size = 0x200, scoped, tag = 'scoped memory for tpu_custom_call.1']
  %s0 = inlined_call_operand.vmem [shape: f32[16,8], index: 0, kind: input, shape index: {}]
  %s1 = inlined_call_operand.hbm [shape: bf16[16,16], index: 1, kind: input, shape index: {}]
  %s2 = inlined_call_operand.vmem [shape: bf16[2,16], index: 2, kind: input, shape index: {}]
  %s3 = inlined_call_operand.hbm [shape: f32[8,32], index: 3, kind: input, shape index: {}]
  %s4 = inlined_call_operand.hbm [shape: f32[1,32], index: 4, kind: input, shape index: {}]
  %s5 = inlined_call_operand.<no memory space> [shape: f32[1,1], index: 5, kind: input, shape index: {}]
  %s6 = inlined_call_operand.vmem [shape: f32[32,32], index: 6, kind: input, shape index: {}]
  %s7 = inlined_call_operand.hbm [shape: f32[1,32], index: 7, kind: input, shape index: {}]
  %s8 = inlined_call_operand.<no memory space> [shape: f32[1,1], index: 8, kind: input, shape index: {}]
  %s9 = inlined_call_operand.hbm [shape: f32[32,32], index: 9, kind: input, shape index: {}]
  %s10 = inlined_call_operand.hbm [shape: f32[1,32], index: 10, kind: input, shape index: {}]
  %s11 = inlined_call_operand.<no memory space> [shape: f32[1,1], index: 11, kind: input, shape index: {}]
  %s12 = inlined_call_operand.vmem [shape: f32[32,128], index: 12, kind: input, shape index: {}]
  %s13 = inlined_call_operand.vmem [shape: f32[1,128], index: 13, kind: input, shape index: {}]
  %s14 = inlined_call_operand.hbm [shape: f32[2,128], index: 14, kind: output, shape index: {}]
  %s15 = sld [smem:[#allocation0]]
  $region90: #{tpu_custom_call.1} parent=0
    _
  %s17 = ssub.s32 1, %s15
  %s18 = scalar_select 0, %s17, %s15
  %v19 = vstv %s5
  %20 = vst [vmem:[#allocation2] sm:$0x1] %v19
  %v21 = vstv %s8
  %22 = vst [vmem:[#allocation3] sm:$0x1] %v21
  %v23 = vstv %s11
  %24 = vst [vmem:[#allocation4] sm:$0x1] %v23
  $region1: #{tpu_custom_call.1} parent=0
    #allocation5 [shape = 'u8[4096]{0}', space=vmem, size = 0x1000, scoped, tag = 'input window, operand 1, single buffered']
    #allocation6 [shape = 's32[1]{0}', space=sflag, size = 0x4, scoped, tag = 'scoped memory for tpu_custom_call.1']
    #allocation7 [shape = 's32[1]{0}', space=sflag, size = 0x4, scoped, tag = 'scoped memory for tpu_custom_call.1']
    #allocation8 [shape = 'u8[4096]{0}', space=vmem, size = 0x1000, scoped, tag = 'input window, operand 3, single buffered']
    #allocation9 [shape = 's32[1]{0}', space=sflag, size = 0x4, scoped, tag = 'scoped memory for tpu_custom_call.1']
    #allocation10 [shape = 'u8[512]{0}', space=vmem, size = 0x400, scoped, tag = 'input window, operand 4, single buffered']
    #allocation11 [shape = 'u8[512]{0}', space=vmem, size = 0x400, scoped, tag = 'input window, operand 7, single buffered']
    #allocation12 [shape = 's32[1]{0}', space=sflag, size = 0x4, scoped, tag = 'scoped memory for tpu_custom_call.1']
    #allocation13 [shape = 'u8[16384]{0}', space=vmem, size = 0x4000, scoped, tag = 'input window, operand 9, single buffered']
    #allocation14 [shape = 'u8[512]{0}', space=vmem, size = 0x400, scoped, tag = 'input window, operand 10, single buffered']
    #allocation15 [shape = 's32[1]{0}', space=sflag, size = 0x4, scoped, tag = 'scoped memory for tpu_custom_call.1']
    #allocation16 [shape = 'u8[1024]{0}', space=vmem, size = 0x400, scoped, tag = 'output window, operand 0, single buffered']
    %25 = vsyncpa [#allocation6], 0
    %26 = vsyncpa [#allocation9], 0
    %27 = vsyncpa [#allocation12], 0
    %28 = vsyncpa [#allocation15], 0
    %29 = vsyncpa [#allocation7], 0
    // Predicated region
    $region2: #{tpu_custom_call.1} parent=1 // pred_check
      _
    $region3: #{tpu_custom_call.1} parent=1 // pred_check_branch
      %31 = sbr.rel (0) target = $region5
    $region4: #{tpu_custom_call.1} parent=1 // pred_region
      _
    $region5: #{tpu_custom_call.1} parent=1 // pred_fallthru
      _
    // Predicated region
    $region6: #{tpu_custom_call.1} parent=1 // pred_check
      _
    $region7: #{tpu_custom_call.1} parent=1 // pred_check_branch
      %33 = sbr.rel (0) target = $region9
    $region8: #{tpu_custom_call.1} parent=1 // pred_region
      %s35 = ssub.s32 128, 128
      %36 = vsyncadd [#allocation6], %s35
      %s37 = sshll.u32 [#allocation5], 4
      %s38 = int_to_ptr.vmem [resolvable:$true] %s37
      %43 = dma.hbm_to_vmem [thread:$0]  %s1, 128, %s38, [#allocation6], 64, 64, 4
    $region9: #{tpu_custom_call.1} parent=1 // pred_fallthru
      _
    // Predicated region
    $region10: #{tpu_custom_call.1} parent=1 // pred_check
      _
    $region11: #{tpu_custom_call.1} parent=1 // pred_check_branch
      %45 = sbr.rel (0) target = $region13
    $region12: #{tpu_custom_call.1} parent=1 // pred_region
      _
    $region13: #{tpu_custom_call.1} parent=1 // pred_fallthru
      _
    // Predicated region
    $region14: #{tpu_custom_call.1} parent=1 // pred_check
      _
    $region15: #{tpu_custom_call.1} parent=1 // pred_check_branch
      %47 = sbr.rel (0) target = $region17
    $region16: #{tpu_custom_call.1} parent=1 // pred_region
      %s49 = ssub.s32 128, 128
      %50 = vsyncadd [#allocation9], %s49
      %s52 = sshll.u32 [#allocation8], 4
      %s53 = int_to_ptr.vmem [resolvable:$true] %s52
      %55 = dma.hbm_to_vmem [thread:$0]  %s3, 128, %s53, [#allocation9]
    $region17: #{tpu_custom_call.1} parent=1 // pred_fallthru
      _
    // Predicated region
    $region18: #{tpu_custom_call.1} parent=1 // pred_check
      _
    $region19: #{tpu_custom_call.1} parent=1 // pred_check_branch
      %57 = sbr.rel (0) target = $region21
    $region20: #{tpu_custom_call.1} parent=1 // pred_region
      %s59 = ssub.s32 16, 16
      %60 = vsyncadd [#allocation9], %s59
      %s62 = sshll.u32 [#allocation10], 4
      %s63 = int_to_ptr.vmem [resolvable:$true] %s62
      %65 = dma.hbm_to_vmem [thread:$0]  %s4, 16, %s63, [#allocation9]
    $region21: #{tpu_custom_call.1} parent=1 // pred_fallthru
      _
    // Predicated region
    $region22: #{tpu_custom_call.1} parent=1 // pred_check
      _
    $region23: #{tpu_custom_call.1} parent=1 // pred_check_branch
      %67 = sbr.rel (0) target = $region25
    $region24: #{tpu_custom_call.1} parent=1 // pred_region
      _
    $region25: #{tpu_custom_call.1} parent=1 // pred_fallthru
      _
    // Predicated region
    $region26: #{tpu_custom_call.1} parent=1 // pred_check
      _
    $region27: #{tpu_custom_call.1} parent=1 // pred_check_branch
      %69 = sbr.rel (0) target = $region29
    $region28: #{tpu_custom_call.1} parent=1 // pred_region
      _
    $region29: #{tpu_custom_call.1} parent=1 // pred_fallthru
      _
    // Predicated region
    $region30: #{tpu_custom_call.1} parent=1 // pred_check
      _
    $region31: #{tpu_custom_call.1} parent=1 // pred_check_branch
      %71 = sbr.rel (0) target = $region33
    $region32: #{tpu_custom_call.1} parent=1 // pred_region
      %s73 = ssub.s32 16, 16
      %74 = vsyncadd [#allocation12], %s73
      %s76 = sshll.u32 [#allocation11], 4
      %s77 = int_to_ptr.vmem [resolvable:$true] %s76
      %79 = dma.hbm_to_vmem [thread:$0]  %s7, 16, %s77, [#allocation12]
    $region33: #{tpu_custom_call.1} parent=1 // pred_fallthru
      _
    // Predicated region
    $region34: #{tpu_custom_call.1} parent=1 // pred_check
      _
    $region35: #{tpu_custom_call.1} parent=1 // pred_check_branch
      %81 = sbr.rel (0) target = $region37
    $region36: #{tpu_custom_call.1} parent=1 // pred_region
      _
    $region37: #{tpu_custom_call.1} parent=1 // pred_fallthru
      _
    // Predicated region
    $region38: #{tpu_custom_call.1} parent=1 // pred_check
      _
    $region39: #{tpu_custom_call.1} parent=1 // pred_check_branch
      %83 = sbr.rel (0) target = $region41
    $region40: #{tpu_custom_call.1} parent=1 // pred_region
      %s85 = ssub.s32 512, 512
      %86 = vsyncadd [#allocation12], %s85
      %s87 = sshll.u32 [#allocation13], 4
      %s88 = int_to_ptr.vmem [resolvable:$true] %s87
      %93 = dma.hbm_to_vmem [thread:$0]  %s9, 512, %s88, [#allocation12], 128, 128, 8
    $region41: #{tpu_custom_call.1} parent=1 // pred_fallthru
      _
    // Predicated region
    $region42: #{tpu_custom_call.1} parent=1 // pred_check
      _
    $region43: #{tpu_custom_call.1} parent=1 // pred_check_branch
      %95 = sbr.rel (0) target = $region45
    $region44: #{tpu_custom_call.1} parent=1 // pred_region
      %s97 = ssub.s32 16, 16
      %98 = vsyncadd [#allocation15], %s97
      %s100 = sshll.u32 [#allocation14], 4
      %s101 = int_to_ptr.vmem [resolvable:$true] %s100
      %103 = dma.hbm_to_vmem [thread:$0]  %s10, 16, %s101, [#allocation15]
    $region45: #{tpu_custom_call.1} parent=1 // pred_fallthru
      _
    // Predicated region
    $region46: #{tpu_custom_call.1} parent=1 // pred_check
      _
    $region47: #{tpu_custom_call.1} parent=1 // pred_check_branch
      %105 = sbr.rel (0) target = $region49
    $region48: #{tpu_custom_call.1} parent=1 // pred_region
      _
    $region49: #{tpu_custom_call.1} parent=1 // pred_fallthru
      _
    // Predicated region
    $region50: #{tpu_custom_call.1} parent=1 // pred_check
      _
    $region51: #{tpu_custom_call.1} parent=1 // pred_check_branch
      %107 = sbr.rel (0) target = $region53
    $region52: #{tpu_custom_call.1} parent=1 // pred_region
      _
    $region53: #{tpu_custom_call.1} parent=1 // pred_fallthru
      _
    // Predicated region
    $region54: #{tpu_custom_call.1} parent=1 // pred_check
      _
    $region55: #{tpu_custom_call.1} parent=1 // pred_check_branch
      %109 = sbr.rel (0) target = $region57
    $region56: #{tpu_custom_call.1} parent=1 // pred_region
      _
    $region57: #{tpu_custom_call.1} parent=1 // pred_fallthru
      _
    // Predicated region
    $region58: #{tpu_custom_call.1} parent=1 // pred_check
      _
    $region59: #{tpu_custom_call.1} parent=1 // pred_check_branch
      %111 = sbr.rel (0) target = $region61
    $region60: #{tpu_custom_call.1} parent=1 // pred_region
      %112 = dma.done [#allocation6], 128
    $region61: #{tpu_custom_call.1} parent=1 // pred_fallthru
      _
    // Predicated region
    $region62: #{tpu_custom_call.1} parent=1 // pred_check
      _
    $region63: #{tpu_custom_call.1} parent=1 // pred_check_branch
      %114 = sbr.rel (0) target = $region65
    $region64: #{tpu_custom_call.1} parent=1 // pred_region
      %115 = dma.done [#allocation9], 128
    $region65: #{tpu_custom_call.1} parent=1 // pred_fallthru
      _
    // Predicated region
    $region66: #{tpu_custom_call.1} parent=1 // pred_check
      _
    $region67: #{tpu_custom_call.1} parent=1 // pred_check_branch
      %117 = sbr.rel (0) target = $region69
    $region68: #{tpu_custom_call.1} parent=1 // pred_region
      %118 = dma.done [#allocation9], 16
    $region69: #{tpu_custom_call.1} parent=1 // pred_fallthru
      _
    // Predicated region
    $region70: #{tpu_custom_call.1} parent=1 // pred_check
      _
    $region71: #{tpu_custom_call.1} parent=1 // pred_check_branch
      %120 = sbr.rel (0) target = $region73
    $region72: #{tpu_custom_call.1} parent=1 // pred_region
      %121 = dma.done [#allocation12], 16
    $region73: #{tpu_custom_call.1} parent=1 // pred_fallthru
      _
    // Predicated region
    $region74: #{tpu_custom_call.1} parent=1 // pred_check
      _
    $region75: #{tpu_custom_call.1} parent=1 // pred_check_branch
      %123 = sbr.rel (0) target = $region77
    $region76: #{tpu_custom_call.1} parent=1 // pred_region
      %124 = dma.done [#allocation12], 512
    $region77: #{tpu_custom_call.1} parent=1 // pred_fallthru
      _
    // Predicated region
    $region78: #{tpu_custom_call.1} parent=1 // pred_check
      _
    $region79: #{tpu_custom_call.1} parent=1 // pred_check_branch
      %126 = sbr.rel (0) target = $region81
    $region80: #{tpu_custom_call.1} parent=1 // pred_region
      %127 = dma.done [#allocation15], 16
    $region81: #{tpu_custom_call.1} parent=1 // pred_fallthru
      _
    %v129 = vld [vmem:[#allocation5] sm:$0xf]
    %v130 = vld [vmem:[#allocation5 + $0x4] sm:$0xf]
    %v131 = vld [vmem:[%s2] sm:$0x1]
    %v132 = vld [vmem:[%s0] sm:$0xff]
    %v133 = vld [vmem:[%s0 + $0x8] sm:$0xff]
    %v134 = vmul.f32 %v132, %v132
    %v135 = vmul.f32 %v133, %v133
    %vm136 = vcmask 64512
    %v137 = vsel %vm136, %v134, 0.0
    %138 = vadd.xlane.f32.xlu0 %v137
    %v139 = vpop.xlane.xlu0 %138
    %v140 = vsel %vm136, %v135, 0.0
    %141 = vadd.xlane.f32.xlu0 %v140
    %v142 = vpop.xlane.xlu0 %141
    %v143 = vmax.f32 %v139, 1e-30
    %v144 = vmax.f32 %v142, 1e-30
    %v145 = vrsqrt.pop %v143
    %v146 = vrsqrt.pop %v144
    %v147 = vmul.f32 %v139, %v145
    %v148 = vmul.f32 %v142, %v146
    %v149 = vtanh.pop %v147
    %v150 = vtanh.pop %v148
    %v151 = vmul.f32 %v149, %v145
    %v152 = vmul.f32 %v150, %v146
    %v153 = vmul.f32 %v151, %v147
    %v154 = vmul.f32 %v152, %v148
    %v155 = vmax.f32 %v153, 1e-15
    %v156 = vmax.f32 %v154, 1e-15
    %vm157 = vcmp.gt.f32.partialorder %v155, 0.996
    %vm158 = vcmp.gt.f32.partialorder %v156, 0.996
    %v159 = vrcp.pop %v155
    %v160 = vrcp.pop %v156
    %v161 = vmul.f32 %v159, 0.996
    %v162 = vmul.f32 %v160, 0.996
    %v163 = vsel %vm157, %v161, 1.0
    %v164 = vsel %vm158, %v162, 1.0
    %v165 = vmul.f32 %v151, %v163
    %v166 = vmul.f32 %v152, %v164
    %v167 = vmul.f32 %v165, %v132
    %v168 = vmul.f32 %v166, %v133
    %v169 = vmul.f32 %v153, %v163
    %v170 = vmul.f32 %v154, %v164
    %v171 = vld [vmem:[#allocation8] sm:$0xff]
    %v172 = vld [vmem:[#allocation10] sm:$0x1]
    %v173 = vld [vmem:[#allocation2] sm:$0x1]
    %v174 = vmax.f32 %v169, 1e-15
    %v175 = vmax.f32 %v170, 1e-15
    %v177 = vsel %vm136, %v167, 0
    %v180 = vsel %vm136, %v168, 0
    %182 = vmatprep.subr.mxu0 0.0
    %183 = vmatpush1.msra.mxu0 %v171
    %184 = vmatprep.subr.mxu0 0.0
    %185 = vmatpush1.msra.mxu0 0.0
    %186 = vmatprep.subr.mxu0 0.0
    %187 = vmatpush1.msra.mxu0 0.0
    %188 = vmatprep.subr.mxu0 0.0
    %189 = vmatpush1.msra.mxu0 0.0
    %190 = vmatprep.subr.mxu0 0.0
    %191 = vmatpush1.msra.mxu0 0.0
    %192 = vmatprep.subr.mxu0 0.0
    %193 = vmatpush1.msra.mxu0 0.0
    %194 = vmatprep.subr.mxu0 0.0
    %195 = vmatpush1.msra.mxu0 0.0
    %196 = vmatprep.subr.mxu0 0.0
    %197 = vmatpush1.msra.mxu0 0.0
    %198 = vmatprep.subr.mxu0 0.0
    %199 = vmatpush1.msra.mxu0 0.0
    %200 = vmatprep.subr.mxu0 0.0
    %201 = vmatpush1.msra.mxu0 0.0
    %202 = vmatprep.subr.mxu0 0.0
    %203 = vmatpush1.msra.mxu0 0.0
    %204 = vmatprep.subr.mxu0 0.0
    %205 = vmatpush1.msra.mxu0 0.0
    %206 = vmatprep.subr.mxu0 0.0
    %207 = vmatpush1.msra.mxu0 0.0
    %208 = vmatprep.subr.mxu0 0.0
    %209 = vmatpush1.msra.mxu0 0.0
    %210 = vmatprep.subr.mxu0 0.0
    %211 = vmatpush1.msra.mxu0 0.0
    %212 = vmatprep.subr.mxu0 0.0
    %213 = vmatpush1.msra.mxu0 0.0
    %214 = vmatprep.subr.mxu0 0.0
    %215 = vmatpush1.msra.mxu0 0.0
    %216 = vmatprep.subr.mxu0 0.0
    %217 = vmatpush1.msra.mxu0 0.0
    %218 = vmatprep.subr.mxu0 0.0
    %219 = vmatpush1.msra.mxu0 0.0
    %220 = vmatprep.subr.mxu0 0.0
    %221 = vmatpush1.msra.mxu0 0.0
    %222 = vmatprep.subr.mxu0 0.0
    %223 = vmatpush1.msra.mxu0 0.0
    %224 = vmatprep.subr.mxu0 0.0
    %225 = vmatpush1.msra.mxu0 0.0
    %226 = vmatprep.subr.mxu0 0.0
    %227 = vmatpush1.msra.mxu0 0.0
    %228 = vmatprep.subr.mxu0 0.0
    %229 = vmatpush1.msra.mxu0 0.0
    %230 = vmatprep.subr.mxu0 0.0
    %231 = vmatpush1.msra.mxu0 0.0
    %232 = vmatprep.subr.mxu0 0.0
    %233 = vmatpush1.msra.mxu0 0.0
    %234 = vmatprep.subr.mxu0 0.0
    %235 = vmatpush1.msra.mxu0 0.0
    %236 = vmatprep.subr.mxu0 0.0
    %237 = vmatpush1.msra.mxu0 0.0
    %238 = vmatprep.subr.mxu0 0.0
    %239 = vmatpush1.msra.mxu0 0.0
    %240 = vmatprep.subr.mxu0 0.0
    %241 = vmatpush1.msra.mxu0 0.0
    %242 = vmatprep.subr.mxu0 0.0
    %243 = vmatpush1.msra.mxu0 0.0
    %244 = vmatprep.subr.mxu0 0.0
    %245 = vmatpush1.msra.mxu0 0.0
    %246 = vmatprep.mubr.f32.mxu0 0.0
    %247 = vmatmul.mubr.f32.gmra.mrb[0].mxu0 %v177
    %v248 = vpop.f32.mrb[0].mxu0
    %v249 = vadd.f32 0.0, %v248
    %v250 = vpop.f32.mrb[0].mxu0
    %251 = vmatprep.mubr.f32.mxu0 0.0
    %252 = vmatmul.mubr.f32.gmra.mrb[0].mxu0 %v180
    %v253 = vpop.f32.mrb[0].mxu0
    %v254 = vadd.f32 0.0, %v253
    %v255 = vpop.f32.mrb[0].mxu0
    %256 = vdwg.mxu0
    %v257 = vmul.f32 %v249, %v249
    %v258 = vmul.f32 %v254, %v254
    %vm259 = vcmask 261120
    %v260 = vsel %vm259, %v257, 0.0
    %261 = vadd.xlane.f32.xlu0 %v260
    %v262 = vpop.xlane.xlu0 %261
    %v263 = vsel %vm259, %v258, 0.0
    %264 = vadd.xlane.f32.xlu0 %v263
    %v265 = vpop.xlane.xlu0 %264
    %v266 = vmax.f32 %v262, 1e-30
    %v267 = vmax.f32 %v265, 1e-30
    %v268 = vrsqrt.pop %v266
    %v269 = vrsqrt.pop %v267
    %v270 = vmul.f32 %v262, %v268
    %v271 = vmul.f32 %v265, %v269
    %v272 = vrcp.pop %v174
    %v273 = vrcp.pop %v175
    %v274 = vmul.f32 %v270, %v272
    %v275 = vmul.f32 %v271, %v273
    %v276 = vmax.f32 %v174, -0.9999999
    %v277 = vmax.f32 %v175, -0.9999999
    %v278 = vmin.f32 %v276, 0.9999999
    %v279 = vmin.f32 %v277, 0.9999999
    %v280 = vadd.f32 %v278, 1.0
    %v281 = vadd.f32 %v279, 1.0
    %v282 = vsub.f32 1.0, %v278
    %v283 = vsub.f32 1.0, %v279
    %v284 = vrcp.pop %v282
    %v285 = vmul.f32 %v280, %v284
    %v286 = vrcp.pop %v283
    %v287 = vmul.f32 %v281, %v286
    %v288 = vlog2.pop %v285
    %v289 = vmul.f32 %v288, 0.6931472
    %v290 = vlog2.pop %v287
    %v291 = vmul.f32 %v290, 0.6931472
    %v292 = vmul.f32 %v289, 0.5
    %v293 = vmul.f32 %v291, 0.5
    %v294 = vmul.f32 %v274, %v292
    %v295 = vmul.f32 %v275, %v293
    %v296 = vtanh.pop %v294
    %v297 = vtanh.pop %v295
    %v298 = vmul.f32 %v296, %v268
    %v299 = vmul.f32 %v297, %v269
    %v300 = vmul.f32 %v298, %v249
    %v301 = vmul.f32 %v299, %v254
    %v302 = vmul.f32 %v298, %v270
    %v303 = vmul.f32 %v299, %v271
    %vm304 = vcmp.eq.f32.partialorder %v262, 0.0
    %vm305 = vcmp.eq.f32.partialorder %v265, 0.0
    %v306 = vsel %vm304, 1, 0
    %v307 = vsel %vm305, 1, 0
    %vm308 = vcmp.eq.s32.totalorder %v306, 1
    %vm309 = vcmp.eq.s32.totalorder %v307, 1
    %v310 = vsel %vm308, 0.0, %v300
    %v311 = vsel %vm309, 0.0, %v301
    %v312 = vsel %vm304, 0.0, %v302
    %v313 = vsel %vm305, 0.0, %v303
    %v314 = vmax.f32 %v312, 1e-15
    %v315 = vmax.f32 %v313, 1e-15
    %v316 = vrcp.pop %v314
    %v317 = vrcp.pop %v315
    %vm318 = vcmp.gt.f32.partialorder %v312, 0.996
    %vm319 = vcmp.gt.f32.partialorder %v313, 0.996
    %v320 = vmul.f32 %v316, 0.996
    %v321 = vmul.f32 %v317, 0.996
    %v322 = vmul.f32 %v320, %v310
    %v323 = vmul.f32 %v321, %v311
    %v324 = vsel %vm318, 1, 0
    %v325 = vsel %vm319, 1, 0
    %vm326 = vcmp.eq.s32.totalorder %v324, 1
    %vm327 = vcmp.eq.s32.totalorder %v325, 1
    %v328 = vsel %vm326, %v322, %v310
    %v329 = vsel %vm327, %v323, %v311
    %v330 = vmin.f32 %v312, 0.996
    %v331 = vmin.f32 %v313, 0.996
    %v332 = vmul.f32 %v330, %v330
    %v333 = vmul.f32 %v331, %v331
    %v334 = vmul.f32 %v173, %v173
    %v336 = vlaneseq
    %v337 = vshrl.u32 %v336, 7
    %v338 = vsub.s32 0, %v337
    %v339 = vrot.slane %v172, %v338
    %v341 = vmul.f32 %v328, %v339
    %v342 = vmul.f32 %v329, %v339
    %v343 = vsel %vm259, %v341, 0.0
    %344 = vadd.xlane.f32.xlu0 %v343
    %v345 = vpop.xlane.xlu0 %344
    %v346 = vsel %vm259, %v342, 0.0
    %347 = vadd.xlane.f32.xlu0 %v346
    %v348 = vpop.xlane.xlu0 %347
    %v349 = vmul.f32 %v345, 2.0
    %v350 = vmul.f32 %v348, 2.0
    %v351 = vadd.f32 %v349, 1.0
    %v352 = vadd.f32 %v350, 1.0
    %v354 = vlaneseq
    %v355 = vshrl.u32 %v354, 7
    %v356 = vsub.s32 0, %v355
    %v357 = vrot.slane %v334, %v356
    %v359 = vadd.f32 %v351, %v357
    %v360 = vadd.f32 %v352, %v357
    %v361 = vsub.f32 1.0, %v332
    %v362 = vsub.f32 1.0, %v333
    %364 = vset.pattern.permute.xlu0 0
    %365 = vperm.xlu0 %364, %v359
    %v366 = vpop.permute.xlu0 %365
    %369 = vset.pattern.permute.xlu0 0
    %370 = vperm.xlu0 %369, %v360
    %v371 = vpop.permute.xlu0 %370
    %v373 = vmul.f32 %v366, %v328
    %v374 = vmul.f32 %v371, %v329
    %v375 = vmul.f32 %v361, %v339
    %v376 = vmul.f32 %v362, %v339
    %v377 = vadd.f32 %v373, %v375
    %v378 = vadd.f32 %v374, %v376
    %v379 = vmul.f32 %v332, %v357
    %v380 = vmul.f32 %v333, %v357
    %v381 = vadd.f32 %v351, %v379
    %v382 = vadd.f32 %v352, %v380
    %v383 = vmax.f32 %v381, 1e-15
    %v384 = vmax.f32 %v382, 1e-15
    %v385 = vrcp.pop %v383
    %v386 = vrcp.pop %v384
    %388 = vset.pattern.permute.xlu0 0
    %389 = vperm.xlu0 %388, %v385
    %v390 = vpop.permute.xlu0 %389
    %393 = vset.pattern.permute.xlu0 0
    %394 = vperm.xlu0 %393, %v386
    %v395 = vpop.permute.xlu0 %394
    %v397 = vmul.f32 %v377, %v390
    %v398 = vmul.f32 %v378, %v395
    %v399 = vmul.f32 %v397, %v397
    %v400 = vmul.f32 %v398, %v398
    %v401 = vsel %vm259, %v399, 0.0
    %402 = vadd.xlane.f32.xlu0 %v401
    %v403 = vpop.xlane.xlu0 %402
    %v404 = vsel %vm259, %v400, 0.0
    %405 = vadd.xlane.f32.xlu0 %v404
    %v406 = vpop.xlane.xlu0 %405
    %v407 = vmax.f32 %v403, 1e-30
    %v408 = vmax.f32 %v406, 1e-30
    %v409 = vrsqrt.pop %v407
    %v410 = vrsqrt.pop %v408
    %v411 = vmul.f32 %v403, %v409
    %v412 = vmul.f32 %v406, %v410
    %vm413 = vcmp.gt.f32.partialorder %v411, 0.996
    %vm414 = vcmp.gt.f32.partialorder %v412, 0.996
    %v415 = vmul.f32 %v409, 0.996
    %v416 = vmul.f32 %v410, 0.996
    %v417 = vmul.f32 %v415, %v397
    %v418 = vmul.f32 %v416, %v398
    %v419 = vsel %vm413, 1, 0
    %v420 = vsel %vm414, 1, 0
    %vm421 = vcmp.eq.s32.totalorder %v419, 1
    %vm422 = vcmp.eq.s32.totalorder %v420, 1
    %v423 = vsel %vm421, %v417, %v397
    %v424 = vsel %vm422, %v418, %v398
    %v425 = vmin.f32 %v411, 0.996
    %v426 = vmin.f32 %v412, 0.996
    %v427 = vmax.f32 %v425, 1e-15
    %v428 = vmax.f32 %v426, 1e-15
    %v429 = vmax.f32 %v427, -0.9999999
    %v430 = vmax.f32 %v428, -0.9999999
    %v431 = vmin.f32 %v429, 0.9999999
    %v432 = vmin.f32 %v430, 0.9999999
    %v433 = vadd.f32 %v431, 1.0
    %v434 = vadd.f32 %v432, 1.0
    %v435 = vsub.f32 1.0, %v431
    %v436 = vsub.f32 1.0, %v432
    %v437 = vrcp.pop %v435
    %v438 = vmul.f32 %v433, %v437
    %v439 = vrcp.pop %v436
    %v440 = vmul.f32 %v434, %v439
    %v441 = vlog2.pop %v438
    %v442 = vmul.f32 %v441, 0.6931472
    %v443 = vlog2.pop %v440
    %v444 = vmul.f32 %v443, 0.6931472
    %v445 = vmul.f32 %v442, 0.5
    %v446 = vmul.f32 %v444, 0.5
    %v447 = vrcp.pop %v427
    %v448 = vrcp.pop %v428
    %v449 = vmul.f32 %v445, %v447
    %v450 = vmul.f32 %v446, %v448
    %v451 = vmul.f32 %v449, %v423
    %v452 = vmul.f32 %v450, %v424
    %v453 = vpack.c.bf16 %v452, %v451
    %v456 = vunpack.c.l.b16 %v129
    %v457 = vunpack.c.l.b16 %v130
    %v458 = vpack.c.b16 %v457, %v456
    %vm459 = vcmask 130048
    %v461 = vsel %vm459, %v458, 0
    %463 = vmatprep.subr.bf16.mxu0 0
    %464 = vmatpush1.bf16.msra.mxu0 %v453
    %465 = vmatprep.subr.bf16.mxu0 0
    %466 = vmatpush1.bf16.msra.mxu0 0
    %467 = vmatprep.subr.bf16.mxu0 0
    %468 = vmatpush1.bf16.msra.mxu0 0
    %469 = vmatprep.subr.bf16.mxu0 0
    %470 = vmatpush1.bf16.msra.mxu0 0
    %471 = vmatprep.subr.bf16.mxu0 0
    %472 = vmatpush1.bf16.msra.mxu0 0
    %473 = vmatprep.subr.bf16.mxu0 0
    %474 = vmatpush1.bf16.msra.mxu0 0
    %475 = vmatprep.subr.bf16.mxu0 0
    %476 = vmatpush1.bf16.msra.mxu0 0
    %477 = vmatprep.subr.bf16.mxu0 0
    %478 = vmatpush1.bf16.msra.mxu0 0
    %479 = vmatprep.subr.bf16.mxu0 0
    %480 = vmatpush1.bf16.msra.mxu0 0
    %481 = vmatprep.subr.bf16.mxu0 0
    %482 = vmatpush1.bf16.msra.mxu0 0
    %483 = vmatprep.subr.bf16.mxu0 0
    %484 = vmatpush1.bf16.msra.mxu0 0
    %485 = vmatprep.subr.bf16.mxu0 0
    %486 = vmatpush1.bf16.msra.mxu0 0
    %487 = vmatprep.subr.bf16.mxu0 0
    %488 = vmatpush1.bf16.msra.mxu0 0
    %489 = vmatprep.subr.bf16.mxu0 0
    %490 = vmatpush1.bf16.msra.mxu0 0
    %491 = vmatprep.subr.bf16.mxu0 0
    %492 = vmatpush1.bf16.msra.mxu0 0
    %493 = vmatprep.subr.bf16.mxu0 0
    %494 = vmatpush1.bf16.msra.mxu0 0
    %495 = vmatprep.mubr.bf16.mxu0 0
    %496 = vmatmul.mubr.bf16.gmra.mrb[0].mxu0 %v461
    %v497 = vpop.f32.mrb[0].mxu0
    %v498 = vadd.f32 0.0, %v497
    %v499 = vpop.f32.mrb[0].mxu0
    %v500 = vpop.f32.mrb[0].mxu0
    %v501 = vadd.f32 0.0, %v500
    %v502 = vpop.f32.mrb[0].mxu0
    %503 = vdwg.mxu0
    %v504 = vmul.f32 %v498, %v498
    %v505 = vmul.f32 %v501, %v501
    %v506 = vsel %vm259, %v504, 0.0
    %507 = vadd.xlane.f32.xlu0 %v506
    %v508 = vpop.xlane.xlu0 %507
    %v509 = vsel %vm259, %v505, 0.0
    %510 = vadd.xlane.f32.xlu0 %v509
    %v511 = vpop.xlane.xlu0 %510
    %v512 = vmax.f32 %v508, 1e-30
    %v513 = vmax.f32 %v511, 1e-30
    %v514 = vrsqrt.pop %v512
    %v515 = vrsqrt.pop %v513
    %v516 = vmul.f32 %v508, %v514
    %v517 = vmul.f32 %v511, %v515
    %v518 = vtanh.pop %v516
    %v519 = vtanh.pop %v517
    %v520 = vmul.f32 %v518, %v514
    %v521 = vmul.f32 %v519, %v515
    %v522 = vmul.f32 %v520, %v516
    %v523 = vmul.f32 %v521, %v517
    %v524 = vmax.f32 %v522, 1e-15
    %v525 = vmax.f32 %v523, 1e-15
    %vm526 = vcmp.gt.f32.partialorder %v524, 0.996
    %vm527 = vcmp.gt.f32.partialorder %v525, 0.996
    %v528 = vrcp.pop %v524
    %v529 = vrcp.pop %v525
    %v530 = vmul.f32 %v528, 0.996
    %v531 = vmul.f32 %v529, 0.996
    %v532 = vsel %vm526, %v530, 1.0
    %v533 = vsel %vm527, %v531, 1.0
    %v534 = vmul.f32 %v520, %v532
    %v535 = vmul.f32 %v521, %v533
    %v536 = vmul.f32 %v534, %v498
    %v537 = vmul.f32 %v535, %v501
    %v538 = vmul.f32 %v522, %v532
    %v539 = vmul.f32 %v523, %v533
    %v540 = vmax.f32 %v538, 1e-15
    %v541 = vmax.f32 %v539, 1e-15
    %v542 = vmax.f32 %v540, -0.9999999
    %v543 = vmax.f32 %v541, -0.9999999
    %v544 = vmin.f32 %v542, 0.9999999
    %v545 = vmin.f32 %v543, 0.9999999
    %v546 = vadd.f32 %v544, 1.0
    %v547 = vadd.f32 %v545, 1.0
    %v548 = vsub.f32 1.0, %v544
    %v549 = vsub.f32 1.0, %v545
    %v550 = vrcp.pop %v548
    %v551 = vmul.f32 %v546, %v550
    %v552 = vrcp.pop %v549
    %v553 = vmul.f32 %v547, %v552
    %v554 = vlog2.pop %v551
    %v555 = vmul.f32 %v554, 0.6931472
    %v556 = vlog2.pop %v553
    %v557 = vmul.f32 %v556, 0.6931472
    %v558 = vmul.f32 %v555, 0.5
    %v559 = vmul.f32 %v557, 0.5
    %v560 = vrcp.pop %v540
    %v561 = vrcp.pop %v541
    %v562 = vmul.f32 %v558, %v560
    %v563 = vmul.f32 %v559, %v561
    %v564 = vmul.f32 %v562, %v536
    %v565 = vmul.f32 %v563, %v537
    %v566 = vmax.f32 %v564, 0.0
    %v567 = vmax.f32 %v565, 0.0
    %v568 = vmul.f32 %v566, %v566
    %v569 = vmul.f32 %v567, %v567
    %v570 = vsel %vm259, %v568, 0.0
    %571 = vadd.xlane.f32.xlu0 %v570
    %v572 = vpop.xlane.xlu0 %571
    %v573 = vsel %vm259, %v569, 0.0
    %574 = vadd.xlane.f32.xlu0 %v573
    %v575 = vpop.xlane.xlu0 %574
    %v576 = vmax.f32 %v572, 1e-30
    %v577 = vmax.f32 %v575, 1e-30
    %v578 = vrsqrt.pop %v576
    %v579 = vrsqrt.pop %v577
    %v580 = vmul.f32 %v572, %v578
    %v581 = vmul.f32 %v575, %v579
    %v582 = vtanh.pop %v580
    %v583 = vtanh.pop %v581
    %v584 = vmul.f32 %v582, %v578
    %v585 = vmul.f32 %v583, %v579
    %v586 = vmul.f32 %v584, %v580
    %v587 = vmul.f32 %v585, %v581
    %v588 = vmax.f32 %v586, 1e-15
    %v589 = vmax.f32 %v587, 1e-15
    %vm590 = vcmp.gt.f32.partialorder %v588, 0.996
    %vm591 = vcmp.gt.f32.partialorder %v589, 0.996
    %v592 = vrcp.pop %v588
    %v593 = vrcp.pop %v589
    %v594 = vmul.f32 %v592, 0.996
    %v595 = vmul.f32 %v593, 0.996
    %v596 = vsel %vm590, %v594, 1.0
    %v597 = vsel %vm591, %v595, 1.0
    %v598 = vmul.f32 %v584, %v596
    %v599 = vmul.f32 %v585, %v597
    %v600 = vmul.f32 %v598, %v566
    %v601 = vmul.f32 %v599, %v567
    %v602 = vmul.f32 %v586, %v596
    %v603 = vmul.f32 %v587, %v597
    %v604 = vmax.f32 %v602, 1e-15
    %v605 = vmax.f32 %v603, 1e-15
    %v606 = vmax.f32 %v604, -0.9999999
    %v607 = vmax.f32 %v605, -0.9999999
    %v608 = vmin.f32 %v606, 0.9999999
    %v609 = vmin.f32 %v607, 0.9999999
    %v610 = vadd.f32 %v608, 1.0
    %v611 = vadd.f32 %v609, 1.0
    %v612 = vsub.f32 1.0, %v608
    %v613 = vsub.f32 1.0, %v609
    %v614 = vrcp.pop %v612
    %v615 = vmul.f32 %v610, %v614
    %v616 = vrcp.pop %v613
    %v617 = vmul.f32 %v611, %v616
    %v618 = vlog2.pop %v615
    %v619 = vmul.f32 %v618, 0.6931472
    %v620 = vlog2.pop %v617
    %v621 = vmul.f32 %v620, 0.6931472
    %v622 = vmul.f32 %v619, 0.5
    %v623 = vmul.f32 %v621, 0.5
    %v624 = vrcp.pop %v604
    %v625 = vrcp.pop %v605
    %v626 = vmul.f32 %v622, %v624
    %v627 = vmul.f32 %v623, %v625
    %v628 = vmul.f32 %v626, %v600
    %v629 = vmul.f32 %v627, %v601
    %v630 = vpack.c.bf16 %v629, %v628
    %v632 = vsel %vm459, %v131, 0
    %634 = vmatprep.subr.bf16.mxu0 0
    %635 = vmatpush1.bf16.msra.mxu0 %v630
    %636 = vmatprep.subr.bf16.mxu0 0
    %637 = vmatpush1.bf16.msra.mxu0 0
    %638 = vmatprep.subr.bf16.mxu0 0
    %639 = vmatpush1.bf16.msra.mxu0 0
    %640 = vmatprep.subr.bf16.mxu0 0
    %641 = vmatpush1.bf16.msra.mxu0 0
    %642 = vmatprep.subr.bf16.mxu0 0
    %643 = vmatpush1.bf16.msra.mxu0 0
    %644 = vmatprep.subr.bf16.mxu0 0
    %645 = vmatpush1.bf16.msra.mxu0 0
    %646 = vmatprep.subr.bf16.mxu0 0
    %647 = vmatpush1.bf16.msra.mxu0 0
    %648 = vmatprep.subr.bf16.mxu0 0
    %649 = vmatpush1.bf16.msra.mxu0 0
    %650 = vmatprep.subr.bf16.mxu0 0
    %651 = vmatpush1.bf16.msra.mxu0 0
    %652 = vmatprep.subr.bf16.mxu0 0
    %653 = vmatpush1.bf16.msra.mxu0 0
    %654 = vmatprep.subr.bf16.mxu0 0
    %655 = vmatpush1.bf16.msra.mxu0 0
    %656 = vmatprep.subr.bf16.mxu0 0
    %657 = vmatpush1.bf16.msra.mxu0 0
    %658 = vmatprep.subr.bf16.mxu0 0
    %659 = vmatpush1.bf16.msra.mxu0 0
    %660 = vmatprep.subr.bf16.mxu0 0
    %661 = vmatpush1.bf16.msra.mxu0 0
    %662 = vmatprep.subr.bf16.mxu0 0
    %663 = vmatpush1.bf16.msra.mxu0 0
    %664 = vmatprep.subr.bf16.mxu0 0
    %665 = vmatpush1.bf16.msra.mxu0 0
    %666 = vmatprep.mubr.bf16.mxu0 0
    %667 = vmatmul.mubr.bf16.gmra.mrb[0].mxu0 %v632
    %v668 = vpop.f32.mrb[0].mxu0
    %v669 = vadd.f32 0.0, %v668
    %v670 = vpop.f32.mrb[0].mxu0
    %v671 = vpop.f32.mrb[0].mxu0
    %v672 = vpop.f32.mrb[0].mxu0
    %673 = vdwg.mxu0
    %v674 = vld [vmem:[%s6] sm:$0xff]
    %v675 = vld [vmem:[%s6 + $0x8] sm:$0xff]
    %v676 = vld [vmem:[%s6 + $0x10] sm:$0xff]
    %v677 = vld [vmem:[%s6 + $0x18] sm:$0xff]
    %v678 = vld [vmem:[#allocation11] sm:$0x1]
    %v679 = vld [vmem:[#allocation3] sm:$0x1]
    %v681 = vsel %vm259, %v600, 0
    %v684 = vsel %vm259, %v601, 0
    %686 = vmatprep.subr.mxu0 0.0
    %687 = vmatpush1.msra.mxu0 %v674
    %688 = vmatprep.subr.mxu0 0.0
    %689 = vmatpush1.msra.mxu0 %v675
    %690 = vmatprep.subr.mxu0 0.0
    %691 = vmatpush1.msra.mxu0 %v676
    %692 = vmatprep.subr.mxu0 0.0
    %693 = vmatpush1.msra.mxu0 %v677
    %694 = vmatprep.subr.mxu0 0.0
    %695 = vmatpush1.msra.mxu0 0.0
    %696 = vmatprep.subr.mxu0 0.0
    %697 = vmatpush1.msra.mxu0 0.0
    %698 = vmatprep.subr.mxu0 0.0
    %699 = vmatpush1.msra.mxu0 0.0
    %700 = vmatprep.subr.mxu0 0.0
    %701 = vmatpush1.msra.mxu0 0.0
    %702 = vmatprep.subr.mxu0 0.0
    %703 = vmatpush1.msra.mxu0 0.0
    %704 = vmatprep.subr.mxu0 0.0
    %705 = vmatpush1.msra.mxu0 0.0
    %706 = vmatprep.subr.mxu0 0.0
    %707 = vmatpush1.msra.mxu0 0.0
    %708 = vmatprep.subr.mxu0 0.0
    %709 = vmatpush1.msra.mxu0 0.0
    %710 = vmatprep.subr.mxu0 0.0
    %711 = vmatpush1.msra.mxu0 0.0
    %712 = vmatprep.subr.mxu0 0.0
    %713 = vmatpush1.msra.mxu0 0.0
    %714 = vmatprep.subr.mxu0 0.0
    %715 = vmatpush1.msra.mxu0 0.0
    %716 = vmatprep.subr.mxu0 0.0
    %717 = vmatpush1.msra.mxu0 0.0
    %718 = vmatprep.subr.mxu0 0.0
    %719 = vmatpush1.msra.mxu0 0.0
    %720 = vmatprep.subr.mxu0 0.0
    %721 = vmatpush1.msra.mxu0 0.0
    %722 = vmatprep.subr.mxu0 0.0
    %723 = vmatpush1.msra.mxu0 0.0
    %724 = vmatprep.subr.mxu0 0.0
    %725 = vmatpush1.msra.mxu0 0.0
    %726 = vmatprep.subr.mxu0 0.0
    %727 = vmatpush1.msra.mxu0 0.0
    %728 = vmatprep.subr.mxu0 0.0
    %729 = vmatpush1.msra.mxu0 0.0
    %730 = vmatprep.subr.mxu0 0.0
    %731 = vmatpush1.msra.mxu0 0.0
    %732 = vmatprep.subr.mxu0 0.0
    %733 = vmatpush1.msra.mxu0 0.0
    %734 = vmatprep.subr.mxu0 0.0
    %735 = vmatpush1.msra.mxu0 0.0
    %736 = vmatprep.subr.mxu0 0.0
    %737 = vmatpush1.msra.mxu0 0.0
    %738 = vmatprep.subr.mxu0 0.0
    %739 = vmatpush1.msra.mxu0 0.0
    %740 = vmatprep.subr.mxu0 0.0
    %741 = vmatpush1.msra.mxu0 0.0
    %742 = vmatprep.subr.mxu0 0.0
    %743 = vmatpush1.msra.mxu0 0.0
    %744 = vmatprep.subr.mxu0 0.0
    %745 = vmatpush1.msra.mxu0 0.0
    %746 = vmatprep.subr.mxu0 0.0
    %747 = vmatpush1.msra.mxu0 0.0
    %748 = vmatprep.subr.mxu0 0.0
    %749 = vmatpush1.msra.mxu0 0.0
    %750 = vmatprep.mubr.f32.mxu0 0.0
    %751 = vmatmul.mubr.f32.gmra.mrb[0].mxu0 %v681
    %v752 = vpop.f32.mrb[0].mxu0
    %v753 = vadd.f32 0.0, %v752
    %v754 = vpop.f32.mrb[0].mxu0
    %755 = vmatprep.mubr.f32.mxu0 0.0
    %756 = vmatmul.mubr.f32.gmra.mrb[0].mxu0 %v684
    %v757 = vpop.f32.mrb[0].mxu0
    %v758 = vadd.f32 0.0, %v757
    %v759 = vpop.f32.mrb[0].mxu0
    %760 = vdwg.mxu0
    %v761 = vmul.f32 %v753, %v753
    %v762 = vmul.f32 %v758, %v758
    %v763 = vsel %vm259, %v761, 0.0
    %764 = vadd.xlane.f32.xlu0 %v763
    %v765 = vpop.xlane.xlu0 %764
    %v766 = vsel %vm259, %v762, 0.0
    %767 = vadd.xlane.f32.xlu0 %v766
    %v768 = vpop.xlane.xlu0 %767
    %v769 = vmax.f32 %v765, 1e-30
    %v770 = vmax.f32 %v768, 1e-30
    %v771 = vrsqrt.pop %v769
    %v772 = vrsqrt.pop %v770
    %v773 = vmul.f32 %v765, %v771
    %v774 = vmul.f32 %v768, %v772
    %v775 = vmul.f32 %v773, %v624
    %v776 = vmul.f32 %v774, %v625
    %v777 = vmul.f32 %v775, %v622
    %v778 = vmul.f32 %v776, %v623
    %v779 = vtanh.pop %v777
    %v780 = vtanh.pop %v778
    %v781 = vmul.f32 %v779, %v771
    %v782 = vmul.f32 %v780, %v772
    %v783 = vmul.f32 %v781, %v753
    %v784 = vmul.f32 %v782, %v758
    %v785 = vmul.f32 %v781, %v773
    %v786 = vmul.f32 %v782, %v774
    %vm787 = vcmp.eq.f32.partialorder %v765, 0.0
    %vm788 = vcmp.eq.f32.partialorder %v768, 0.0
    %v789 = vsel %vm787, 1, 0
    %v790 = vsel %vm788, 1, 0
    %vm791 = vcmp.eq.s32.totalorder %v789, 1
    %vm792 = vcmp.eq.s32.totalorder %v790, 1
    %v793 = vsel %vm791, 0.0, %v783
    %v794 = vsel %vm792, 0.0, %v784
    %v795 = vsel %vm787, 0.0, %v785
    %v796 = vsel %vm788, 0.0, %v786
    %v797 = vmax.f32 %v795, 1e-15
    %v798 = vmax.f32 %v796, 1e-15
    %v799 = vrcp.pop %v797
    %v800 = vrcp.pop %v798
    %vm801 = vcmp.gt.f32.partialorder %v795, 0.996
    %vm802 = vcmp.gt.f32.partialorder %v796, 0.996
    %v803 = vmul.f32 %v799, 0.996
    %v804 = vmul.f32 %v800, 0.996
    %v805 = vmul.f32 %v803, %v793
    %v806 = vmul.f32 %v804, %v794
    %v807 = vsel %vm801, 1, 0
    %v808 = vsel %vm802, 1, 0
    %vm809 = vcmp.eq.s32.totalorder %v807, 1
    %vm810 = vcmp.eq.s32.totalorder %v808, 1
    %v811 = vsel %vm809, %v805, %v793
    %v812 = vsel %vm810, %v806, %v794
    %v813 = vmin.f32 %v795, 0.996
    %v814 = vmin.f32 %v796, 0.996
    %v815 = vmul.f32 %v813, %v813
    %v816 = vmul.f32 %v814, %v814
    %v817 = vmul.f32 %v679, %v679
    %v819 = vlaneseq
    %v820 = vshrl.u32 %v819, 7
    %v821 = vsub.s32 0, %v820
    %v822 = vrot.slane %v678, %v821
    %v824 = vmul.f32 %v811, %v822
    %v825 = vmul.f32 %v812, %v822
    %v826 = vsel %vm259, %v824, 0.0
    %827 = vadd.xlane.f32.xlu0 %v826
    %v828 = vpop.xlane.xlu0 %827
    %v829 = vsel %vm259, %v825, 0.0
    %830 = vadd.xlane.f32.xlu0 %v829
    %v831 = vpop.xlane.xlu0 %830
    %v832 = vmul.f32 %v828, 2.0
    %v833 = vmul.f32 %v831, 2.0
    %v834 = vadd.f32 %v832, 1.0
    %v835 = vadd.f32 %v833, 1.0
    %v837 = vlaneseq
    %v838 = vshrl.u32 %v837, 7
    %v839 = vsub.s32 0, %v838
    %v840 = vrot.slane %v817, %v839
    %v842 = vadd.f32 %v834, %v840
    %v843 = vadd.f32 %v835, %v840
    %v844 = vsub.f32 1.0, %v815
    %v845 = vsub.f32 1.0, %v816
    %847 = vset.pattern.permute.xlu0 0
    %848 = vperm.xlu0 %847, %v842
    %v849 = vpop.permute.xlu0 %848
    %852 = vset.pattern.permute.xlu0 0
    %853 = vperm.xlu0 %852, %v843
    %v854 = vpop.permute.xlu0 %853
    %v856 = vmul.f32 %v849, %v811
    %v857 = vmul.f32 %v854, %v812
    %v858 = vmul.f32 %v844, %v822
    %v859 = vmul.f32 %v845, %v822
    %v860 = vadd.f32 %v856, %v858
    %v861 = vadd.f32 %v857, %v859
    %v862 = vmul.f32 %v815, %v840
    %v863 = vmul.f32 %v816, %v840
    %v864 = vadd.f32 %v834, %v862
    %v865 = vadd.f32 %v835, %v863
    %v866 = vmax.f32 %v864, 1e-15
    %v867 = vmax.f32 %v865, 1e-15
    %v868 = vrcp.pop %v866
    %v869 = vrcp.pop %v867
    %871 = vset.pattern.permute.xlu0 0
    %872 = vperm.xlu0 %871, %v868
    %v873 = vpop.permute.xlu0 %872
    %876 = vset.pattern.permute.xlu0 0
    %877 = vperm.xlu0 %876, %v869
    %v878 = vpop.permute.xlu0 %877
    %v880 = vmul.f32 %v860, %v873
    %v881 = vmul.f32 %v861, %v878
    %v882 = vmul.f32 %v880, %v880
    %v883 = vmul.f32 %v881, %v881
    %v884 = vsel %vm259, %v882, 0.0
    %885 = vadd.xlane.f32.xlu0 %v884
    %v886 = vpop.xlane.xlu0 %885
    %v887 = vsel %vm259, %v883, 0.0
    %888 = vadd.xlane.f32.xlu0 %v887
    %v889 = vpop.xlane.xlu0 %888
    %v890 = vmax.f32 %v886, 1e-30
    %v891 = vmax.f32 %v889, 1e-30
    %v892 = vrsqrt.pop %v890
    %v893 = vrsqrt.pop %v891
    %v894 = vmul.f32 %v886, %v892
    %v895 = vmul.f32 %v889, %v893
    %vm896 = vcmp.gt.f32.partialorder %v894, 0.996
    %vm897 = vcmp.gt.f32.partialorder %v895, 0.996
    %v898 = vmul.f32 %v892, 0.996
    %v899 = vmul.f32 %v893, 0.996
    %v900 = vmul.f32 %v898, %v880
    %v901 = vmul.f32 %v899, %v881
    %v902 = vsel %vm896, 1, 0
    %v903 = vsel %vm897, 1, 0
    %vm904 = vcmp.eq.s32.totalorder %v902, 1
    %vm905 = vcmp.eq.s32.totalorder %v903, 1
    %v906 = vsel %vm904, %v900, %v880
    %v907 = vsel %vm905, %v901, %v881
    %v908 = vmin.f32 %v894, 0.996
    %v909 = vmin.f32 %v895, 0.996
    %v910 = vmax.f32 %v908, 1e-15
    %v911 = vmax.f32 %v909, 1e-15
    %v912 = vmax.f32 %v910, -0.9999999
    %v913 = vmax.f32 %v911, -0.9999999
    %v914 = vmin.f32 %v912, 0.9999999
    %v915 = vmin.f32 %v913, 0.9999999
    %v916 = vadd.f32 %v914, 1.0
    %v917 = vadd.f32 %v915, 1.0
    %v918 = vsub.f32 1.0, %v914
    %v919 = vsub.f32 1.0, %v915
    %v920 = vrcp.pop %v918
    %v921 = vmul.f32 %v916, %v920
    %v922 = vrcp.pop %v919
    %v923 = vmul.f32 %v917, %v922
    %v924 = vlog2.pop %v921
    %v925 = vmul.f32 %v924, 0.6931472
    %v926 = vlog2.pop %v923
    %v927 = vmul.f32 %v926, 0.6931472
    %v928 = vmul.f32 %v925, 0.5
    %v929 = vmul.f32 %v927, 0.5
    %v930 = vrcp.pop %v910
    %v931 = vrcp.pop %v911
    %v932 = vmul.f32 %v928, %v930
    %v933 = vmul.f32 %v929, %v931
    %v934 = vmul.f32 %v932, %v906
    %v935 = vmul.f32 %v933, %v907
    %v936 = vpack.c.bf16 %v935, %v934
    %937 = vmatprep.subr.bf16.mxu0 0
    %938 = vmatpush1.bf16.msra.mxu0 %v936
    %939 = vmatprep.subr.bf16.mxu0 0
    %940 = vmatpush1.bf16.msra.mxu0 0
    %941 = vmatprep.subr.bf16.mxu0 0
    %942 = vmatpush1.bf16.msra.mxu0 0
    %943 = vmatprep.subr.bf16.mxu0 0
    %944 = vmatpush1.bf16.msra.mxu0 0
    %945 = vmatprep.subr.bf16.mxu0 0
    %946 = vmatpush1.bf16.msra.mxu0 0
    %947 = vmatprep.subr.bf16.mxu0 0
    %948 = vmatpush1.bf16.msra.mxu0 0
    %949 = vmatprep.subr.bf16.mxu0 0
    %950 = vmatpush1.bf16.msra.mxu0 0
    %951 = vmatprep.subr.bf16.mxu0 0
    %952 = vmatpush1.bf16.msra.mxu0 0
    %953 = vmatprep.subr.bf16.mxu0 0
    %954 = vmatpush1.bf16.msra.mxu0 0
    %955 = vmatprep.subr.bf16.mxu0 0
    %956 = vmatpush1.bf16.msra.mxu0 0
    %957 = vmatprep.subr.bf16.mxu0 0
    %958 = vmatpush1.bf16.msra.mxu0 0
    %959 = vmatprep.subr.bf16.mxu0 0
    %960 = vmatpush1.bf16.msra.mxu0 0
    %961 = vmatprep.subr.bf16.mxu0 0
    %962 = vmatpush1.bf16.msra.mxu0 0
    %963 = vmatprep.subr.bf16.mxu0 0
    %964 = vmatpush1.bf16.msra.mxu0 0
    %965 = vmatprep.subr.bf16.mxu0 0
    %966 = vmatpush1.bf16.msra.mxu0 0
    %967 = vmatprep.subr.bf16.mxu0 0
    %968 = vmatpush1.bf16.msra.mxu0 0
    %969 = vmatprep.mubr.bf16.mxu0 0
    %970 = vmatmul.mubr.bf16.gmra.mrb[0].mxu0 %v461
    %v971 = vpop.f32.mrb[0].mxu0
    %v972 = vadd.f32 0.0, %v971
    %v973 = vpop.f32.mrb[0].mxu0
    %v974 = vpop.f32.mrb[0].mxu0
    %v975 = vadd.f32 0.0, %v974
    %v976 = vpop.f32.mrb[0].mxu0
    %977 = vdwg.mxu0
    %v978 = vmul.f32 %v972, %v972
    %v979 = vmul.f32 %v975, %v975
    %v980 = vsel %vm259, %v978, 0.0
    %981 = vadd.xlane.f32.xlu0 %v980
    %v982 = vpop.xlane.xlu0 %981
    %v983 = vsel %vm259, %v979, 0.0
    %984 = vadd.xlane.f32.xlu0 %v983
    %v985 = vpop.xlane.xlu0 %984
    %v986 = vmax.f32 %v982, 1e-30
    %v987 = vmax.f32 %v985, 1e-30
    %v988 = vrsqrt.pop %v986
    %v989 = vrsqrt.pop %v987
    %v990 = vmul.f32 %v982, %v988
    %v991 = vmul.f32 %v985, %v989
    %v992 = vtanh.pop %v990
    %v993 = vtanh.pop %v991
    %v994 = vmul.f32 %v992, %v988
    %v995 = vmul.f32 %v993, %v989
    %v996 = vmul.f32 %v994, %v990
    %v997 = vmul.f32 %v995, %v991
    %v998 = vmax.f32 %v996, 1e-15
    %v999 = vmax.f32 %v997, 1e-15
    %vm1000 = vcmp.gt.f32.partialorder %v998, 0.996
    %vm1001 = vcmp.gt.f32.partialorder %v999, 0.996
    %v1002 = vrcp.pop %v998
    %v1003 = vrcp.pop %v999
    %v1004 = vmul.f32 %v1002, 0.996
    %v1005 = vmul.f32 %v1003, 0.996
    %v1006 = vsel %vm1000, %v1004, 1.0
    %v1007 = vsel %vm1001, %v1005, 1.0
    %v1008 = vmul.f32 %v994, %v1006
    %v1009 = vmul.f32 %v995, %v1007
    %v1010 = vmul.f32 %v1008, %v972
    %v1011 = vmul.f32 %v1009, %v975
    %v1012 = vmul.f32 %v996, %v1006
    %v1013 = vmul.f32 %v997, %v1007
    %v1014 = vmax.f32 %v1012, 1e-15
    %v1015 = vmax.f32 %v1013, 1e-15
    %v1016 = vmax.f32 %v1014, -0.9999999
    %v1017 = vmax.f32 %v1015, -0.9999999
    %v1018 = vmin.f32 %v1016, 0.9999999
    %v1019 = vmin.f32 %v1017, 0.9999999
    %v1020 = vadd.f32 %v1018, 1.0
    %v1021 = vadd.f32 %v1019, 1.0
    %v1022 = vsub.f32 1.0, %v1018
    %v1023 = vsub.f32 1.0, %v1019
    %v1024 = vrcp.pop %v1022
    %v1025 = vmul.f32 %v1020, %v1024
    %v1026 = vrcp.pop %v1023
    %v1027 = vmul.f32 %v1021, %v1026
    %v1028 = vlog2.pop %v1025
    %v1029 = vmul.f32 %v1028, 0.6931472
    %v1030 = vlog2.pop %v1027
    %v1031 = vmul.f32 %v1030, 0.6931472
    %v1032 = vmul.f32 %v1029, 0.5
    %v1033 = vmul.f32 %v1031, 0.5
    %v1034 = vrcp.pop %v1014
    %v1035 = vrcp.pop %v1015
    %v1036 = vmul.f32 %v1032, %v1034
    %v1037 = vmul.f32 %v1033, %v1035
    %v1038 = vmul.f32 %v1036, %v1010
    %v1039 = vmul.f32 %v1037, %v1011
    %v1040 = vmax.f32 %v1038, 0.0
    %v1041 = vmax.f32 %v1039, 0.0
    %v1042 = vmul.f32 %v1040, %v1040
    %v1043 = vmul.f32 %v1041, %v1041
    %v1044 = vsel %vm259, %v1042, 0.0
    %1045 = vadd.xlane.f32.xlu0 %v1044
    %v1046 = vpop.xlane.xlu0 %1045
    %v1047 = vsel %vm259, %v1043, 0.0
    %1048 = vadd.xlane.f32.xlu0 %v1047
    %v1049 = vpop.xlane.xlu0 %1048
    %v1050 = vmax.f32 %v1046, 1e-30
    %v1051 = vmax.f32 %v1049, 1e-30
    %v1052 = vrsqrt.pop %v1050
    %v1053 = vrsqrt.pop %v1051
    %v1054 = vmul.f32 %v1046, %v1052
    %v1055 = vmul.f32 %v1049, %v1053
    %v1056 = vtanh.pop %v1054
    %v1057 = vtanh.pop %v1055
    %v1058 = vmul.f32 %v1056, %v1052
    %v1059 = vmul.f32 %v1057, %v1053
    %v1060 = vmul.f32 %v1058, %v1054
    %v1061 = vmul.f32 %v1059, %v1055
    %v1062 = vmax.f32 %v1060, 1e-15
    %v1063 = vmax.f32 %v1061, 1e-15
    %vm1064 = vcmp.gt.f32.partialorder %v1062, 0.996
    %vm1065 = vcmp.gt.f32.partialorder %v1063, 0.996
    %v1066 = vrcp.pop %v1062
    %v1067 = vrcp.pop %v1063
    %v1068 = vmul.f32 %v1066, 0.996
    %v1069 = vmul.f32 %v1067, 0.996
    %v1070 = vsel %vm1064, %v1068, 1.0
    %v1071 = vsel %vm1065, %v1069, 1.0
    %v1072 = vmul.f32 %v1058, %v1070
    %v1073 = vmul.f32 %v1059, %v1071
    %v1074 = vmul.f32 %v1072, %v1040
    %v1075 = vmul.f32 %v1073, %v1041
    %v1076 = vmul.f32 %v1060, %v1070
    %v1077 = vmul.f32 %v1061, %v1071
    %v1078 = vmax.f32 %v1076, 1e-15
    %v1079 = vmax.f32 %v1077, 1e-15
    %v1080 = vmax.f32 %v1078, -0.9999999
    %v1081 = vmax.f32 %v1079, -0.9999999
    %v1082 = vmin.f32 %v1080, 0.9999999
    %v1083 = vmin.f32 %v1081, 0.9999999
    %v1084 = vadd.f32 %v1082, 1.0
    %v1085 = vadd.f32 %v1083, 1.0
    %v1086 = vsub.f32 1.0, %v1082
    %v1087 = vsub.f32 1.0, %v1083
    %v1088 = vrcp.pop %v1086
    %v1089 = vmul.f32 %v1084, %v1088
    %v1090 = vrcp.pop %v1087
    %v1091 = vmul.f32 %v1085, %v1090
    %v1092 = vlog2.pop %v1089
    %v1093 = vmul.f32 %v1092, 0.6931472
    %v1094 = vlog2.pop %v1091
    %v1095 = vmul.f32 %v1094, 0.6931472
    %v1096 = vmul.f32 %v1093, 0.5
    %v1097 = vmul.f32 %v1095, 0.5
    %v1098 = vrcp.pop %v1078
    %v1099 = vrcp.pop %v1079
    %v1100 = vmul.f32 %v1096, %v1098
    %v1101 = vmul.f32 %v1097, %v1099
    %v1102 = vmul.f32 %v1100, %v1074
    %v1103 = vmul.f32 %v1101, %v1075
    %v1104 = vpack.c.bf16 %v1103, %v1102
    %1105 = vmatprep.subr.bf16.mxu0 0
    %1106 = vmatpush1.bf16.msra.mxu0 %v1104
    %1107 = vmatprep.subr.bf16.mxu0 0
    %1108 = vmatpush1.bf16.msra.mxu0 0
    %1109 = vmatprep.subr.bf16.mxu0 0
    %1110 = vmatpush1.bf16.msra.mxu0 0
    %1111 = vmatprep.subr.bf16.mxu0 0
    %1112 = vmatpush1.bf16.msra.mxu0 0
    %1113 = vmatprep.subr.bf16.mxu0 0
    %1114 = vmatpush1.bf16.msra.mxu0 0
    %1115 = vmatprep.subr.bf16.mxu0 0
    %1116 = vmatpush1.bf16.msra.mxu0 0
    %1117 = vmatprep.subr.bf16.mxu0 0
    %1118 = vmatpush1.bf16.msra.mxu0 0
    %1119 = vmatprep.subr.bf16.mxu0 0
    %1120 = vmatpush1.bf16.msra.mxu0 0
    %1121 = vmatprep.subr.bf16.mxu0 0
    %1122 = vmatpush1.bf16.msra.mxu0 0
    %1123 = vmatprep.subr.bf16.mxu0 0
    %1124 = vmatpush1.bf16.msra.mxu0 0
    %1125 = vmatprep.subr.bf16.mxu0 0
    %1126 = vmatpush1.bf16.msra.mxu0 0
    %1127 = vmatprep.subr.bf16.mxu0 0
    %1128 = vmatpush1.bf16.msra.mxu0 0
    %1129 = vmatprep.subr.bf16.mxu0 0
    %1130 = vmatpush1.bf16.msra.mxu0 0
    %1131 = vmatprep.subr.bf16.mxu0 0
    %1132 = vmatpush1.bf16.msra.mxu0 0
    %1133 = vmatprep.subr.bf16.mxu0 0
    %1134 = vmatpush1.bf16.msra.mxu0 0
    %1135 = vmatprep.subr.bf16.mxu0 0
    %1136 = vmatpush1.bf16.msra.mxu0 0
    %1137 = vmatprep.mubr.bf16.mxu0 0
    %1138 = vmatmul.mubr.bf16.gmra.mrb[0].mxu0 %v632
    %v1139 = vpop.f32.mrb[0].mxu0
    %v1140 = vadd.f32 0.0, %v1139
    %v1141 = vpop.f32.mrb[0].mxu0
    %v1142 = vpop.f32.mrb[0].mxu0
    %v1143 = vpop.f32.mrb[0].mxu0
    %1144 = vdwg.mxu0
    %v1145 = vld [vmem:[#allocation13] sm:$0xff]
    %v1146 = vld [vmem:[#allocation13 + $0x8] sm:$0xff]
    %v1147 = vld [vmem:[#allocation13 + $0x10] sm:$0xff]
    %v1148 = vld [vmem:[#allocation13 + $0x18] sm:$0xff]
    %v1149 = vld [vmem:[#allocation14] sm:$0x1]
    %v1150 = vld [vmem:[#allocation4] sm:$0x1]
    %v1152 = vsel %vm259, %v1074, 0
    %v1155 = vsel %vm259, %v1075, 0
    %1157 = vmatprep.subr.mxu0 0.0
    %1158 = vmatpush1.msra.mxu0 %v1145
    %1159 = vmatprep.subr.mxu0 0.0
    %1160 = vmatpush1.msra.mxu0 %v1146
    %1161 = vmatprep.subr.mxu0 0.0
    %1162 = vmatpush1.msra.mxu0 %v1147
    %1163 = vmatprep.subr.mxu0 0.0
    %1164 = vmatpush1.msra.mxu0 %v1148
    %1165 = vmatprep.subr.mxu0 0.0
    %1166 = vmatpush1.msra.mxu0 0.0
    %1167 = vmatprep.subr.mxu0 0.0
    %1168 = vmatpush1.msra.mxu0 0.0
    %1169 = vmatprep.subr.mxu0 0.0
    %1170 = vmatpush1.msra.mxu0 0.0
    %1171 = vmatprep.subr.mxu0 0.0
    %1172 = vmatpush1.msra.mxu0 0.0
    %1173 = vmatprep.subr.mxu0 0.0
    %1174 = vmatpush1.msra.mxu0 0.0
    %1175 = vmatprep.subr.mxu0 0.0
    %1176 = vmatpush1.msra.mxu0 0.0
    %1177 = vmatprep.subr.mxu0 0.0
    %1178 = vmatpush1.msra.mxu0 0.0
    %1179 = vmatprep.subr.mxu0 0.0
    %1180 = vmatpush1.msra.mxu0 0.0
    %1181 = vmatprep.subr.mxu0 0.0
    %1182 = vmatpush1.msra.mxu0 0.0
    %1183 = vmatprep.subr.mxu0 0.0
    %1184 = vmatpush1.msra.mxu0 0.0
    %1185 = vmatprep.subr.mxu0 0.0
    %1186 = vmatpush1.msra.mxu0 0.0
    %1187 = vmatprep.subr.mxu0 0.0
    %1188 = vmatpush1.msra.mxu0 0.0
    %1189 = vmatprep.subr.mxu0 0.0
    %1190 = vmatpush1.msra.mxu0 0.0
    %1191 = vmatprep.subr.mxu0 0.0
    %1192 = vmatpush1.msra.mxu0 0.0
    %1193 = vmatprep.subr.mxu0 0.0
    %1194 = vmatpush1.msra.mxu0 0.0
    %1195 = vmatprep.subr.mxu0 0.0
    %1196 = vmatpush1.msra.mxu0 0.0
    %1197 = vmatprep.subr.mxu0 0.0
    %1198 = vmatpush1.msra.mxu0 0.0
    %1199 = vmatprep.subr.mxu0 0.0
    %1200 = vmatpush1.msra.mxu0 0.0
    %1201 = vmatprep.subr.mxu0 0.0
    %1202 = vmatpush1.msra.mxu0 0.0
    %1203 = vmatprep.subr.mxu0 0.0
    %1204 = vmatpush1.msra.mxu0 0.0
    %1205 = vmatprep.subr.mxu0 0.0
    %1206 = vmatpush1.msra.mxu0 0.0
    %1207 = vmatprep.subr.mxu0 0.0
    %1208 = vmatpush1.msra.mxu0 0.0
    %1209 = vmatprep.subr.mxu0 0.0
    %1210 = vmatpush1.msra.mxu0 0.0
    %1211 = vmatprep.subr.mxu0 0.0
    %1212 = vmatpush1.msra.mxu0 0.0
    %1213 = vmatprep.subr.mxu0 0.0
    %1214 = vmatpush1.msra.mxu0 0.0
    %1215 = vmatprep.subr.mxu0 0.0
    %1216 = vmatpush1.msra.mxu0 0.0
    %1217 = vmatprep.subr.mxu0 0.0
    %1218 = vmatpush1.msra.mxu0 0.0
    %1219 = vmatprep.subr.mxu0 0.0
    %1220 = vmatpush1.msra.mxu0 0.0
    %1221 = vmatprep.mubr.f32.mxu0 0.0
    %1222 = vmatmul.mubr.f32.gmra.mrb[0].mxu0 %v1152
    %v1223 = vpop.f32.mrb[0].mxu0
    %v1224 = vadd.f32 0.0, %v1223
    %v1225 = vpop.f32.mrb[0].mxu0
    %1226 = vmatprep.mubr.f32.mxu0 0.0
    %1227 = vmatmul.mubr.f32.gmra.mrb[0].mxu0 %v1155
    %v1228 = vpop.f32.mrb[0].mxu0
    %v1229 = vadd.f32 0.0, %v1228
    %v1230 = vpop.f32.mrb[0].mxu0
    %1231 = vdwg.mxu0
    %v1232 = vmul.f32 %v1224, %v1224
    %v1233 = vmul.f32 %v1229, %v1229
    %v1234 = vsel %vm259, %v1232, 0.0
    %1235 = vadd.xlane.f32.xlu0 %v1234
    %v1236 = vpop.xlane.xlu0 %1235
    %v1237 = vsel %vm259, %v1233, 0.0
    %1238 = vadd.xlane.f32.xlu0 %v1237
    %v1239 = vpop.xlane.xlu0 %1238
    %v1240 = vmax.f32 %v1236, 1e-30
    %v1241 = vmax.f32 %v1239, 1e-30
    %v1242 = vrsqrt.pop %v1240
    %v1243 = vrsqrt.pop %v1241
    %v1244 = vmul.f32 %v1236, %v1242
    %v1245 = vmul.f32 %v1239, %v1243
    %v1246 = vmul.f32 %v1244, %v1098
    %v1247 = vmul.f32 %v1245, %v1099
    %v1248 = vmul.f32 %v1246, %v1096
    %v1249 = vmul.f32 %v1247, %v1097
    %v1250 = vtanh.pop %v1248
    %v1251 = vtanh.pop %v1249
    %v1252 = vmul.f32 %v1250, %v1242
    %v1253 = vmul.f32 %v1251, %v1243
    %v1254 = vmul.f32 %v1252, %v1224
    %v1255 = vmul.f32 %v1253, %v1229
    %v1256 = vmul.f32 %v1252, %v1244
    %v1257 = vmul.f32 %v1253, %v1245
    %vm1258 = vcmp.eq.f32.partialorder %v1236, 0.0
    %vm1259 = vcmp.eq.f32.partialorder %v1239, 0.0
    %v1260 = vsel %vm1258, 1, 0
    %v1261 = vsel %vm1259, 1, 0
    %vm1262 = vcmp.eq.s32.totalorder %v1260, 1
    %vm1263 = vcmp.eq.s32.totalorder %v1261, 1
    %v1264 = vsel %vm1262, 0.0, %v1254
    %v1265 = vsel %vm1263, 0.0, %v1255
    %v1266 = vsel %vm1258, 0.0, %v1256
    %v1267 = vsel %vm1259, 0.0, %v1257
    %v1268 = vmax.f32 %v1266, 1e-15
    %v1269 = vmax.f32 %v1267, 1e-15
    %v1270 = vrcp.pop %v1268
    %v1271 = vrcp.pop %v1269
    %vm1272 = vcmp.gt.f32.partialorder %v1266, 0.996
    %vm1273 = vcmp.gt.f32.partialorder %v1267, 0.996
    %v1274 = vmul.f32 %v1270, 0.996
    %v1275 = vmul.f32 %v1271, 0.996
    %v1276 = vmul.f32 %v1274, %v1264
    %v1277 = vmul.f32 %v1275, %v1265
    %v1278 = vsel %vm1272, 1, 0
    %v1279 = vsel %vm1273, 1, 0
    %vm1280 = vcmp.eq.s32.totalorder %v1278, 1
    %vm1281 = vcmp.eq.s32.totalorder %v1279, 1
    %v1282 = vsel %vm1280, %v1276, %v1264
    %v1283 = vsel %vm1281, %v1277, %v1265
    %v1284 = vmin.f32 %v1266, 0.996
    %v1285 = vmin.f32 %v1267, 0.996
    %v1286 = vmul.f32 %v1284, %v1284
    %v1287 = vmul.f32 %v1285, %v1285
    %v1288 = vmul.f32 %v1150, %v1150
    %v1290 = vlaneseq
    %v1291 = vshrl.u32 %v1290, 7
    %v1292 = vsub.s32 0, %v1291
    %v1293 = vrot.slane %v1149, %v1292
    %v1295 = vmul.f32 %v1282, %v1293
    %v1296 = vmul.f32 %v1283, %v1293
    %v1297 = vsel %vm259, %v1295, 0.0
    %1298 = vadd.xlane.f32.xlu0 %v1297
    %v1299 = vpop.xlane.xlu0 %1298
    %v1300 = vsel %vm259, %v1296, 0.0
    %1301 = vadd.xlane.f32.xlu0 %v1300
    %v1302 = vpop.xlane.xlu0 %1301
    %v1303 = vmul.f32 %v1299, 2.0
    %v1304 = vmul.f32 %v1302, 2.0
    %v1305 = vadd.f32 %v1303, 1.0
    %v1306 = vadd.f32 %v1304, 1.0
    %v1308 = vlaneseq
    %v1309 = vshrl.u32 %v1308, 7
    %v1310 = vsub.s32 0, %v1309
    %v1311 = vrot.slane %v1288, %v1310
    %v1313 = vadd.f32 %v1305, %v1311
    %v1314 = vadd.f32 %v1306, %v1311
    %v1315 = vsub.f32 1.0, %v1286
    %v1316 = vsub.f32 1.0, %v1287
    %1318 = vset.pattern.permute.xlu0 0
    %1319 = vperm.xlu0 %1318, %v1313
    %v1320 = vpop.permute.xlu0 %1319
    %1323 = vset.pattern.permute.xlu0 0
    %1324 = vperm.xlu0 %1323, %v1314
    %v1325 = vpop.permute.xlu0 %1324
    %v1327 = vmul.f32 %v1320, %v1282
    %v1328 = vmul.f32 %v1325, %v1283
    %v1329 = vmul.f32 %v1315, %v1293
    %v1330 = vmul.f32 %v1316, %v1293
    %v1331 = vadd.f32 %v1327, %v1329
    %v1332 = vadd.f32 %v1328, %v1330
    %v1333 = vmul.f32 %v1286, %v1311
    %v1334 = vmul.f32 %v1287, %v1311
    %v1335 = vadd.f32 %v1305, %v1333
    %v1336 = vadd.f32 %v1306, %v1334
    %v1337 = vmax.f32 %v1335, 1e-15
    %v1338 = vmax.f32 %v1336, 1e-15
    %v1339 = vrcp.pop %v1337
    %v1340 = vrcp.pop %v1338
    %1342 = vset.pattern.permute.xlu0 0
    %1343 = vperm.xlu0 %1342, %v1339
    %v1344 = vpop.permute.xlu0 %1343
    %1347 = vset.pattern.permute.xlu0 0
    %1348 = vperm.xlu0 %1347, %v1340
    %v1349 = vpop.permute.xlu0 %1348
    %v1351 = vmul.f32 %v1331, %v1344
    %v1352 = vmul.f32 %v1332, %v1349
    %v1353 = vmul.f32 %v1351, %v1351
    %v1354 = vmul.f32 %v1352, %v1352
    %v1355 = vsel %vm259, %v1353, 0.0
    %1356 = vadd.xlane.f32.xlu0 %v1355
    %v1357 = vpop.xlane.xlu0 %1356
    %v1358 = vsel %vm259, %v1354, 0.0
    %1359 = vadd.xlane.f32.xlu0 %v1358
    %v1360 = vpop.xlane.xlu0 %1359
    %v1361 = vmax.f32 %v1357, 1e-30
    %v1362 = vmax.f32 %v1360, 1e-30
    %v1363 = vrsqrt.pop %v1361
    %v1364 = vrsqrt.pop %v1362
    %v1365 = vmul.f32 %v1357, %v1363
    %v1366 = vmul.f32 %v1360, %v1364
    %vm1367 = vcmp.gt.f32.partialorder %v1365, 0.996
    %vm1368 = vcmp.gt.f32.partialorder %v1366, 0.996
    %v1369 = vmul.f32 %v1363, 0.996
    %v1370 = vmul.f32 %v1364, 0.996
    %v1371 = vmul.f32 %v1369, %v1351
    %v1372 = vmul.f32 %v1370, %v1352
    %v1373 = vsel %vm1367, 1, 0
    %v1374 = vsel %vm1368, 1, 0
    %vm1375 = vcmp.eq.s32.totalorder %v1373, 1
    %vm1376 = vcmp.eq.s32.totalorder %v1374, 1
    %v1377 = vsel %vm1375, %v1371, %v1351
    %v1378 = vsel %vm1376, %v1372, %v1352
    %v1379 = vmin.f32 %v1365, 0.996
    %v1380 = vmin.f32 %v1366, 0.996
    %v1381 = vmax.f32 %v1379, 1e-15
    %v1382 = vmax.f32 %v1380, 1e-15
    %v1383 = vmax.f32 %v1381, -0.9999999
    %v1384 = vmax.f32 %v1382, -0.9999999
    %v1385 = vmin.f32 %v1383, 0.9999999
    %v1386 = vmin.f32 %v1384, 0.9999999
    %v1387 = vadd.f32 %v1385, 1.0
    %v1388 = vadd.f32 %v1386, 1.0
    %v1389 = vsub.f32 1.0, %v1385
    %v1390 = vsub.f32 1.0, %v1386
    %v1391 = vrcp.pop %v1389
    %v1392 = vmul.f32 %v1387, %v1391
    %v1393 = vrcp.pop %v1390
    %v1394 = vmul.f32 %v1388, %v1393
    %v1395 = vlog2.pop %v1392
    %v1396 = vmul.f32 %v1395, 0.6931472
    %v1397 = vlog2.pop %v1394
    %v1398 = vmul.f32 %v1397, 0.6931472
    %v1399 = vmul.f32 %v1396, 0.5
    %v1400 = vmul.f32 %v1398, 0.5
    %v1401 = vrcp.pop %v1381
    %v1402 = vrcp.pop %v1382
    %v1403 = vmul.f32 %v1399, %v1401
    %v1404 = vmul.f32 %v1400, %v1402
    %v1405 = vmul.f32 %v1403, %v1377
    %v1406 = vmul.f32 %v1404, %v1378
    %v1407 = vpack.c.bf16 %v1406, %v1405
    %1408 = vmatprep.subr.bf16.mxu0 0
    %1409 = vmatpush1.bf16.msra.mxu0 %v1407
    %1410 = vmatprep.subr.bf16.mxu0 0
    %1411 = vmatpush1.bf16.msra.mxu0 0
    %1412 = vmatprep.subr.bf16.mxu0 0
    %1413 = vmatpush1.bf16.msra.mxu0 0
    %1414 = vmatprep.subr.bf16.mxu0 0
    %1415 = vmatpush1.bf16.msra.mxu0 0
    %1416 = vmatprep.subr.bf16.mxu0 0
    %1417 = vmatpush1.bf16.msra.mxu0 0
    %1418 = vmatprep.subr.bf16.mxu0 0
    %1419 = vmatpush1.bf16.msra.mxu0 0
    %1420 = vmatprep.subr.bf16.mxu0 0
    %1421 = vmatpush1.bf16.msra.mxu0 0
    %1422 = vmatprep.subr.bf16.mxu0 0
    %1423 = vmatpush1.bf16.msra.mxu0 0
    %1424 = vmatprep.subr.bf16.mxu0 0
    %1425 = vmatpush1.bf16.msra.mxu0 0
    %1426 = vmatprep.subr.bf16.mxu0 0
    %1427 = vmatpush1.bf16.msra.mxu0 0
    %1428 = vmatprep.subr.bf16.mxu0 0
    %1429 = vmatpush1.bf16.msra.mxu0 0
    %1430 = vmatprep.subr.bf16.mxu0 0
    %1431 = vmatpush1.bf16.msra.mxu0 0
    %1432 = vmatprep.subr.bf16.mxu0 0
    %1433 = vmatpush1.bf16.msra.mxu0 0
    %1434 = vmatprep.subr.bf16.mxu0 0
    %1435 = vmatpush1.bf16.msra.mxu0 0
    %1436 = vmatprep.subr.bf16.mxu0 0
    %1437 = vmatpush1.bf16.msra.mxu0 0
    %1438 = vmatprep.subr.bf16.mxu0 0
    %1439 = vmatpush1.bf16.msra.mxu0 0
    %1440 = vmatprep.mubr.bf16.mxu0 0
    %1441 = vmatmul.mubr.bf16.gmra.mrb[0].mxu0 %v461
    %v1442 = vpop.f32.mrb[0].mxu0
    %v1443 = vadd.f32 0.0, %v1442
    %v1444 = vpop.f32.mrb[0].mxu0
    %v1445 = vpop.f32.mrb[0].mxu0
    %v1446 = vadd.f32 0.0, %v1445
    %v1447 = vpop.f32.mrb[0].mxu0
    %1448 = vdwg.mxu0
    %v1449 = vmul.f32 %v1443, %v1443
    %v1450 = vmul.f32 %v1446, %v1446
    %v1451 = vsel %vm259, %v1449, 0.0
    %1452 = vadd.xlane.f32.xlu0 %v1451
    %v1453 = vpop.xlane.xlu0 %1452
    %v1454 = vsel %vm259, %v1450, 0.0
    %1455 = vadd.xlane.f32.xlu0 %v1454
    %v1456 = vpop.xlane.xlu0 %1455
    %v1457 = vmax.f32 %v1453, 1e-30
    %v1458 = vmax.f32 %v1456, 1e-30
    %v1459 = vrsqrt.pop %v1457
    %v1460 = vrsqrt.pop %v1458
    %v1461 = vmul.f32 %v1453, %v1459
    %v1462 = vmul.f32 %v1456, %v1460
    %v1463 = vtanh.pop %v1461
    %v1464 = vtanh.pop %v1462
    %v1465 = vmul.f32 %v1463, %v1459
    %v1466 = vmul.f32 %v1464, %v1460
    %v1467 = vmul.f32 %v1465, %v1461
    %v1468 = vmul.f32 %v1466, %v1462
    %v1469 = vmax.f32 %v1467, 1e-15
    %v1470 = vmax.f32 %v1468, 1e-15
    %vm1471 = vcmp.gt.f32.partialorder %v1469, 0.996
    %vm1472 = vcmp.gt.f32.partialorder %v1470, 0.996
    %v1473 = vrcp.pop %v1469
    %v1474 = vrcp.pop %v1470
    %v1475 = vmul.f32 %v1473, 0.996
    %v1476 = vmul.f32 %v1474, 0.996
    %v1477 = vsel %vm1471, %v1475, 1.0
    %v1478 = vsel %vm1472, %v1476, 1.0
    %v1479 = vmul.f32 %v1465, %v1477
    %v1480 = vmul.f32 %v1466, %v1478
    %v1481 = vmul.f32 %v1479, %v1443
    %v1482 = vmul.f32 %v1480, %v1446
    %v1483 = vmul.f32 %v1467, %v1477
    %v1484 = vmul.f32 %v1468, %v1478
    %v1485 = vmax.f32 %v1483, 1e-15
    %v1486 = vmax.f32 %v1484, 1e-15
    %v1487 = vmax.f32 %v1485, -0.9999999
    %v1488 = vmax.f32 %v1486, -0.9999999
    %v1489 = vmin.f32 %v1487, 0.9999999
    %v1490 = vmin.f32 %v1488, 0.9999999
    %v1491 = vadd.f32 %v1489, 1.0
    %v1492 = vadd.f32 %v1490, 1.0
    %v1493 = vsub.f32 1.0, %v1489
    %v1494 = vsub.f32 1.0, %v1490
    %v1495 = vrcp.pop %v1493
    %v1496 = vmul.f32 %v1491, %v1495
    %v1497 = vrcp.pop %v1494
    %v1498 = vmul.f32 %v1492, %v1497
    %v1499 = vlog2.pop %v1496
    %v1500 = vmul.f32 %v1499, 0.6931472
    %v1501 = vlog2.pop %v1498
    %v1502 = vmul.f32 %v1501, 0.6931472
    %v1503 = vmul.f32 %v1500, 0.5
    %v1504 = vmul.f32 %v1502, 0.5
    %v1505 = vrcp.pop %v1485
    %v1506 = vrcp.pop %v1486
    %v1507 = vmul.f32 %v1503, %v1505
    %v1508 = vmul.f32 %v1504, %v1506
    %v1509 = vmul.f32 %v1507, %v1481
    %v1510 = vmul.f32 %v1508, %v1482
    %v1511 = vmax.f32 %v1509, 0.0
    %v1512 = vmax.f32 %v1510, 0.0
    %v1513 = vmul.f32 %v1511, %v1511
    %v1514 = vmul.f32 %v1512, %v1512
    %v1515 = vsel %vm259, %v1513, 0.0
    %1516 = vadd.xlane.f32.xlu0 %v1515
    %v1517 = vpop.xlane.xlu0 %1516
    %v1518 = vsel %vm259, %v1514, 0.0
    %1519 = vadd.xlane.f32.xlu0 %v1518
    %v1520 = vpop.xlane.xlu0 %1519
    %v1521 = vmax.f32 %v1517, 1e-30
    %v1522 = vmax.f32 %v1520, 1e-30
    %v1523 = vrsqrt.pop %v1521
    %v1524 = vrsqrt.pop %v1522
    %v1525 = vmul.f32 %v1517, %v1523
    %v1526 = vmul.f32 %v1520, %v1524
    %v1527 = vtanh.pop %v1525
    %v1528 = vtanh.pop %v1526
    %v1529 = vmul.f32 %v1527, %v1523
    %v1530 = vmul.f32 %v1528, %v1524
    %v1531 = vmul.f32 %v1529, %v1525
    %v1532 = vmul.f32 %v1530, %v1526
    %v1533 = vmax.f32 %v1531, 1e-15
    %v1534 = vmax.f32 %v1532, 1e-15
    %vm1535 = vcmp.gt.f32.partialorder %v1533, 0.996
    %vm1536 = vcmp.gt.f32.partialorder %v1534, 0.996
    %v1537 = vrcp.pop %v1533
    %v1538 = vrcp.pop %v1534
    %v1539 = vmul.f32 %v1537, 0.996
    %v1540 = vmul.f32 %v1538, 0.996
    %v1541 = vsel %vm1535, %v1539, 1.0
    %v1542 = vsel %vm1536, %v1540, 1.0
    %v1543 = vmul.f32 %v1529, %v1541
    %v1544 = vmul.f32 %v1530, %v1542
    %v1545 = vmul.f32 %v1543, %v1511
    %v1546 = vmul.f32 %v1544, %v1512
    %v1547 = vmul.f32 %v1531, %v1541
    %v1548 = vmul.f32 %v1532, %v1542
    %v1549 = vmax.f32 %v1547, 1e-15
    %v1550 = vmax.f32 %v1548, 1e-15
    %v1551 = vmax.f32 %v1549, -0.9999999
    %v1552 = vmax.f32 %v1550, -0.9999999
    %v1553 = vmin.f32 %v1551, 0.9999999
    %v1554 = vmin.f32 %v1552, 0.9999999
    %v1555 = vadd.f32 %v1553, 1.0
    %v1556 = vadd.f32 %v1554, 1.0
    %v1557 = vsub.f32 1.0, %v1553
    %v1558 = vsub.f32 1.0, %v1554
    %v1559 = vrcp.pop %v1557
    %v1560 = vmul.f32 %v1555, %v1559
    %v1561 = vrcp.pop %v1558
    %v1562 = vmul.f32 %v1556, %v1561
    %v1563 = vlog2.pop %v1560
    %v1564 = vmul.f32 %v1563, 0.6931472
    %v1565 = vlog2.pop %v1562
    %v1566 = vmul.f32 %v1565, 0.6931472
    %v1567 = vmul.f32 %v1564, 0.5
    %v1568 = vmul.f32 %v1566, 0.5
    %v1569 = vrcp.pop %v1549
    %v1570 = vrcp.pop %v1550
    %v1571 = vmul.f32 %v1567, %v1569
    %v1572 = vmul.f32 %v1568, %v1570
    %v1573 = vmul.f32 %v1571, %v1545
    %v1574 = vmul.f32 %v1572, %v1546
    %v1575 = vpack.c.bf16 %v1574, %v1573
    %1576 = vmatprep.subr.bf16.mxu0 0
    %1577 = vmatpush1.bf16.msra.mxu0 %v1575
    %1578 = vmatprep.subr.bf16.mxu0 0
    %1579 = vmatpush1.bf16.msra.mxu0 0
    %1580 = vmatprep.subr.bf16.mxu0 0
    %1581 = vmatpush1.bf16.msra.mxu0 0
    %1582 = vmatprep.subr.bf16.mxu0 0
    %1583 = vmatpush1.bf16.msra.mxu0 0
    %1584 = vmatprep.subr.bf16.mxu0 0
    %1585 = vmatpush1.bf16.msra.mxu0 0
    %1586 = vmatprep.subr.bf16.mxu0 0
    %1587 = vmatpush1.bf16.msra.mxu0 0
    %1588 = vmatprep.subr.bf16.mxu0 0
    %1589 = vmatpush1.bf16.msra.mxu0 0
    %1590 = vmatprep.subr.bf16.mxu0 0
    %1591 = vmatpush1.bf16.msra.mxu0 0
    %1592 = vmatprep.subr.bf16.mxu0 0
    %1593 = vmatpush1.bf16.msra.mxu0 0
    %1594 = vmatprep.subr.bf16.mxu0 0
    %1595 = vmatpush1.bf16.msra.mxu0 0
    %1596 = vmatprep.subr.bf16.mxu0 0
    %1597 = vmatpush1.bf16.msra.mxu0 0
    %1598 = vmatprep.subr.bf16.mxu0 0
    %1599 = vmatpush1.bf16.msra.mxu0 0
    %1600 = vmatprep.subr.bf16.mxu0 0
    %1601 = vmatpush1.bf16.msra.mxu0 0
    %1602 = vmatprep.subr.bf16.mxu0 0
    %1603 = vmatpush1.bf16.msra.mxu0 0
    %1604 = vmatprep.subr.bf16.mxu0 0
    %1605 = vmatpush1.bf16.msra.mxu0 0
    %1606 = vmatprep.subr.bf16.mxu0 0
    %1607 = vmatpush1.bf16.msra.mxu0 0
    %1608 = vmatprep.mubr.bf16.mxu0 0
    %1609 = vmatmul.mubr.bf16.gmra.mrb[0].mxu0 %v632
    %v1610 = vpop.f32.mrb[0].mxu0
    %v1611 = vadd.f32 0.0, %v1610
    %v1612 = vpop.f32.mrb[0].mxu0
    %v1613 = vpop.f32.mrb[0].mxu0
    %v1614 = vpop.f32.mrb[0].mxu0
    %1615 = vdwg.mxu0
    %v1616 = vmax.f32 %v669, 0.0
    %v1617 = vmax.f32 %v1140, 0.0
    %v1618 = vadd.f32 %v1616, %v1617
    %v1619 = vmax.f32 %v1611, 0.0
    %v1620 = vadd.f32 %v1618, %v1619
    %v1621 = vld [vmem:[%s12] sm:$0xff]
    %v1622 = vld [vmem:[%s12 + $0x8] sm:$0xff]
    %v1623 = vld [vmem:[%s12 + $0x10] sm:$0xff]
    %v1624 = vld [vmem:[%s12 + $0x18] sm:$0xff]
    %v1625 = vld [vmem:[%s13] sm:$0x1]
    %v1627 = vlaneseq
    %v1628 = vshrl.u32 %v1627, 7
    %v1629 = vsub.s32 0, %v1628
    %v1630 = vrot.slane %v1625, %v1629
    %v1633 = vsel %vm259, %v1620, 0
    %1635 = vmatprep.subr.mxu0 0.0
    %1636 = vmatpush1.msra.mxu0 %v1621
    %1637 = vmatprep.subr.mxu0 0.0
    %1638 = vmatpush1.msra.mxu0 %v1622
    %1639 = vmatprep.subr.mxu0 0.0
    %1640 = vmatpush1.msra.mxu0 %v1623
    %1641 = vmatprep.subr.mxu0 0.0
    %1642 = vmatpush1.msra.mxu0 %v1624
    %1643 = vmatprep.subr.mxu0 0.0
    %1644 = vmatpush1.msra.mxu0 0.0
    %1645 = vmatprep.subr.mxu0 0.0
    %1646 = vmatpush1.msra.mxu0 0.0
    %1647 = vmatprep.subr.mxu0 0.0
    %1648 = vmatpush1.msra.mxu0 0.0
    %1649 = vmatprep.subr.mxu0 0.0
    %1650 = vmatpush1.msra.mxu0 0.0
    %1651 = vmatprep.subr.mxu0 0.0
    %1652 = vmatpush1.msra.mxu0 0.0
    %1653 = vmatprep.subr.mxu0 0.0
    %1654 = vmatpush1.msra.mxu0 0.0
    %1655 = vmatprep.subr.mxu0 0.0
    %1656 = vmatpush1.msra.mxu0 0.0
    %1657 = vmatprep.subr.mxu0 0.0
    %1658 = vmatpush1.msra.mxu0 0.0
    %1659 = vmatprep.subr.mxu0 0.0
    %1660 = vmatpush1.msra.mxu0 0.0
    %1661 = vmatprep.subr.mxu0 0.0
    %1662 = vmatpush1.msra.mxu0 0.0
    %1663 = vmatprep.subr.mxu0 0.0
    %1664 = vmatpush1.msra.mxu0 0.0
    %1665 = vmatprep.subr.mxu0 0.0
    %1666 = vmatpush1.msra.mxu0 0.0
    %1667 = vmatprep.subr.mxu0 0.0
    %1668 = vmatpush1.msra.mxu0 0.0
    %1669 = vmatprep.subr.mxu0 0.0
    %1670 = vmatpush1.msra.mxu0 0.0
    %1671 = vmatprep.subr.mxu0 0.0
    %1672 = vmatpush1.msra.mxu0 0.0
    %1673 = vmatprep.subr.mxu0 0.0
    %1674 = vmatpush1.msra.mxu0 0.0
    %1675 = vmatprep.subr.mxu0 0.0
    %1676 = vmatpush1.msra.mxu0 0.0
    %1677 = vmatprep.subr.mxu0 0.0
    %1678 = vmatpush1.msra.mxu0 0.0
    %1679 = vmatprep.subr.mxu0 0.0
    %1680 = vmatpush1.msra.mxu0 0.0
    %1681 = vmatprep.subr.mxu0 0.0
    %1682 = vmatpush1.msra.mxu0 0.0
    %1683 = vmatprep.subr.mxu0 0.0
    %1684 = vmatpush1.msra.mxu0 0.0
    %1685 = vmatprep.subr.mxu0 0.0
    %1686 = vmatpush1.msra.mxu0 0.0
    %1687 = vmatprep.subr.mxu0 0.0
    %1688 = vmatpush1.msra.mxu0 0.0
    %1689 = vmatprep.subr.mxu0 0.0
    %1690 = vmatpush1.msra.mxu0 0.0
    %1691 = vmatprep.subr.mxu0 0.0
    %1692 = vmatpush1.msra.mxu0 0.0
    %1693 = vmatprep.subr.mxu0 0.0
    %1694 = vmatpush1.msra.mxu0 0.0
    %1695 = vmatprep.subr.mxu0 0.0
    %1696 = vmatpush1.msra.mxu0 0.0
    %1697 = vmatprep.subr.mxu0 0.0
    %1698 = vmatpush1.msra.mxu0 0.0
    %1699 = vmatprep.mubr.f32.mxu0 0.0
    %1700 = vmatmul.mubr.f32.gmra.mrb[0].mxu0 %v1633
    %v1701 = vpop.f32.mrb[0].mxu0
    %v1702 = vadd.f32 %v1630, %v1701
    %v1703 = vpop.f32.mrb[0].mxu0
    %1704 = vdwg.mxu0
    %vm1705 = vcmask 1041408
    %v1706 = vsel %vm1705, %v1702, -inf
    %1707 = vmax.xlane.f32.xlu0 %v1706
    %v1708 = vpop.xlane.xlu0 %1707
    %v1709 = vsub.f32 %v1702, %v1708
    %v1710 = vmul.f32 %v1709, 1.442695
    %v1711 = vpow.pop %v1710
    %v1712 = vsel %vm1705, %v1711, 0.0
    %1713 = vadd.xlane.f32.xlu0 %v1712
    %v1714 = vpop.xlane.xlu0 %1713
    %v1715 = vlog2.pop %v1714
    %v1716 = vmul.f32 %v1715, 0.6931472
    %v1717 = vsub.f32 %v1709, %v1716
    %1718 = vst [vmem:[#allocation16] sm:$0x3] %v1717
    // Predicated region
    $region82: #{tpu_custom_call.1} parent=1 // pred_check
      _
    $region83: #{tpu_custom_call.1} parent=1 // pred_check_branch
      %1720 = sbr.rel (0) target = $region85
    $region84: #{tpu_custom_call.1} parent=1 // pred_region
      %s1722 = ssub.s32 32, 32
      %1723 = vsyncadd [#allocation7], %s1722
      %s1725 = sshll.u32 [#allocation16], 4
      %s1726 = int_to_ptr.vmem [resolvable:$true] %s1725
      %1728 = dma.vmem_to_hbm [thread:$0]  %s1726, 32, %s14, [#allocation7]
    $region85: #{tpu_custom_call.1} parent=1 // pred_fallthru
      _
    // Predicated region
    $region86: #{tpu_custom_call.1} parent=1 // pred_check
      _
    $region87: #{tpu_custom_call.1} parent=1 // pred_check_branch
      %1730 = sbr.rel (0) target = $region89
    $region88: #{tpu_custom_call.1} parent=1 // pred_region
      %1731 = dma.done [#allocation7], 32
    $region89: #{tpu_custom_call.1} parent=1 // pred_fallthru
      _
    %1732 = vsyncpa [#allocation6], 1
    %1733 = vsyncpa [#allocation9], 1
    %1734 = vsyncpa [#allocation12], 1
    %1735 = vsyncpa [#allocation15], 1
    %1736 = vsyncpa [#allocation7], 1

</llo_original>
